<compile_context>
chip_gen: v5e
topology: v5e:2x2
jax: 0.10.0
libtpu: 0.0.40
codegen_flags: <defaults>
</compile_context>

<pallas_src>
import jax
import jax.numpy as jnp
import numpy as np
from jax import lax
from jax.experimental import pallas as pl
from jax.experimental.pallas import tpu as pltpu


_VMEM_LIMIT_BYTES = 48 * 1024 * 1024  # safe on v5e/v6e (128 MiB) and v7x (64 MiB/TC)
_INV_SQRT2 = 0.7071067811865475


def _gelu_exact(x):
    # torch.nn.functional.gelu default (exact erf form); lax.erf lowers on TPU.
    return 0.5 * x * (1.0 + lax.erf(x * _INV_SQRT2))


# ----------------------------- Pallas kernels ------------------------------

def _ffn1_geglu_kernel(x_ref, wx_ref, wg_ref, bx_ref, bg_ref, h_ref,
                       accx_ref, accg_ref):
    """h = (x @ Wx + bx) * gelu(x @ Wg + bg); K-tiled, dual f32 accumulators."""
    k = pl.program_id(2)

    @pl.when(k == 0)
    def _():
        # Fold the biases into the accumulator init (saves a finalize add).
        accx_ref[...] = jnp.broadcast_to(bx_ref[...], accx_ref.shape)
        accg_ref[...] = jnp.broadcast_to(bg_ref[...], accg_ref.shape)

    x = x_ref[...]
    accx_ref[...] += jnp.dot(x, wx_ref[...], preferred_element_type=jnp.float32)
    accg_ref[...] += jnp.dot(x, wg_ref[...], preferred_element_type=jnp.float32)

    @pl.when(k == pl.num_programs(2) - 1)
    def _():
        h_ref[...] = (accx_ref[...] * _gelu_exact(accg_ref[...])).astype(h_ref.dtype)


def _ffn2_kernel(h_ref, w_ref, b_ref, o_ref, acc_ref):
    """o = h @ W2 + b2; K-tiled, f32 accumulator; bias folded into init."""
    k = pl.program_id(2)

    @pl.when(k == 0)
    def _():
        acc_ref[...] = jnp.broadcast_to(b_ref[...], acc_ref.shape)

    acc_ref[...] += jnp.dot(h_ref[...], w_ref[...],
                            preferred_element_type=jnp.float32)

    @pl.when(k == pl.num_programs(2) - 1)
    def _():
        o_ref[...] = acc_ref[...].astype(o_ref.dtype)


# ------------------------------ Tile selection ------------------------------

def _row_tile_and_pad(M):
    """Row (sublane) tile for the token axis; M is padded to a multiple of it."""
    tm = 512 if M >= 512 else 256
    m_pad = ((M + tm - 1) // tm) * tm
    return tm, m_pad


def _pick_tile(size, candidates=(512, 256, 128)):
    """Lane / contraction tile: largest 128-multiple candidate dividing `size`.

    Dims smaller than 128 (e.g. dim=32 in the demo) legally use the full extent.
    """
    for c in candidates:
        if c <= size and size % c == 0:
            return c
    return size


# ------------------------------ Pallas wrappers -----------------------------

def geglu_linear(x2d, w1, b1_2d, hidden, tm, h_dtype=jnp.bfloat16):
    """x2d: [M, K] bf16; w1: [K, 2H] bf16; b1_2d: [1, 2H] f32 -> [M, H] bf16.

    The value/gate halves of w1/b1 are addressed with column-offset index_maps
    (no sliced copy of w1 is ever materialized in HBM).
    """
    M, K = x2d.shape
    H = hidden
    assert M % tm == 0
    assert H % 128 == 0, "GEGLU column-offset addressing needs hidden % 128 == 0"
    tn = _pick_tile(H)
    tk = _pick_tile(K)
    gate_off = H // tn  # block-index offset of the gate half inside w1/b1
    grid = (M // tm, H // tn, K // tk)

    return pl.pallas_call(
        _ffn1_geglu_kernel,
        out_shape=jax.ShapeDtypeStruct((M, H), h_dtype),
        grid_spec=pltpu.PrefetchScalarGridSpec(
            num_scalar_prefetch=0,
            grid=grid,
            in_specs=[
                pl.BlockSpec((tm, tk), lambda i, j, k: (i, k)),              # x
                pl.BlockSpec((tk, tn), lambda i, j, k: (k, j)),              # W1 value half
                pl.BlockSpec((tk, tn), lambda i, j, k: (k, j + gate_off)),   # W1 gate half
                pl.BlockSpec((1, tn), lambda i, j, k: (0, j)),               # b1 value half
                pl.BlockSpec((1, tn), lambda i, j, k: (0, j + gate_off)),    # b1 gate half
            ],
            out_specs=pl.BlockSpec((tm, tn), lambda i, j, k: (i, j)),
            scratch_shapes=[pltpu.VMEM((tm, tn), jnp.float32),
                            pltpu.VMEM((tm, tn), jnp.float32)],
        ),
        compiler_params=pltpu.CompilerParams(
            dimension_semantics=("parallel", "parallel", "arbitrary"),
            vmem_limit_bytes=_VMEM_LIMIT_BYTES),
    )(x2d, w1, w1, b1_2d, b1_2d)


def linear_bias(h, w2, b2_2d, tm, out_dtype):
    """h: [M, K] bf16; w2: [K, N] bf16; b2_2d: [1, N] f32 -> [M, N] out_dtype."""
    M, K = h.shape
    N = w2.shape[1]
    assert M % tm == 0
    tn = _pick_tile(N)
    tk = _pick_tile(K)
    grid = (M // tm, N // tn, K // tk)

    return pl.pallas_call(
        _ffn2_kernel,
        out_shape=jax.ShapeDtypeStruct((M, N), out_dtype),
        grid_spec=pltpu.PrefetchScalarGridSpec(
            num_scalar_prefetch=0,
            grid=grid,
            in_specs=[
                pl.BlockSpec((tm, tk), lambda i, j, k: (i, k)),
                pl.BlockSpec((tk, tn), lambda i, j, k: (k, j)),
                pl.BlockSpec((1, tn), lambda i, j, k: (0, j)),
            ],
            out_specs=pl.BlockSpec((tm, tn), lambda i, j, k: (i, j)),
            scratch_shapes=[pltpu.VMEM((tm, tn), jnp.float32)],
        ),
        compiler_params=pltpu.CompilerParams(
            dimension_semantics=("parallel", "parallel", "arbitrary"),
            vmem_limit_bytes=_VMEM_LIMIT_BYTES),
    )(h, w2, b2_2d)


# ------------------------------- Forward pass -------------------------------

def feedforward_forward(x, w1, b1, w2, b2):
    """FeedForward.forward: Linear(dim, 2*hidden) -> GEGLU -> Dropout(0) -> Linear(hidden, dim).

    x: [B, N, dim]; w1: [dim, 2*hidden]; b1: [2*hidden]; w2: [hidden, dim]; b2: [dim].
    """
    B, N, dim = x.shape
    hidden = w1.shape[1] // 2

    M = B * N
    tm, m_pad = _row_tile_and_pad(M)

    # bf16 matmul operands (f32 accumulation happens inside the kernels).
    x2 = x.reshape(M, dim).astype(jnp.bfloat16)
    if m_pad != M:
        x2 = jnp.pad(x2, ((0, m_pad - M), (0, 0)))
    w1b = w1.astype(jnp.bfloat16)
    w2b = w2.astype(jnp.bfloat16)
    b1_2d = b1.reshape(1, -1).astype(jnp.float32)
    b2_2d = b2.reshape(1, -1).astype(jnp.float32)

    # Fused Linear + GEGLU; the [M, 2*hidden] intermediate never hits HBM.
    h = geglu_linear(x2, w1b, b1_2d, hidden, tm)                  # [m_pad, hidden] bf16
    # Dropout(p=0.0) is the identity at inference.
    out = linear_bias(h, w2b, b2_2d, tm, out_dtype=x.dtype)       # [m_pad, dim]
    return out[:M].reshape(B, N, dim)


# ------------------------------ Pure-JAX reference ---------------------------

def reference_forward(x, w1, b1, w2, b2):
    y = jnp.einsum("bnd,de->bne", x, w1) + b1
    a, g = jnp.split(y, 2, axis=-1)
    h = a * jax.nn.gelu(g, approximate=False)   # torch F.gelu default (erf)
    return jnp.einsum("bnh,hd->bnd", h, w2) + b2


# ----------------------------------- Main ------------------------------------

if __name__ == "__main__":
    key = jax.random.PRNGKey(0)
    k1, k2, k3, k4, k5 = jax.random.split(key, 5)

    # Small shapes consistent with the module: FeedForward(dim=32, mult=4)
    batch, seq, dim, mult = 2, 8, 32, 4
    hidden = dim * mult                 # 128
    inner = hidden * 2                  # 256 (GEGLU doubles the first linear)

    x = jax.random.normal(k1, (batch, seq, dim), jnp.float32)
    # nn.Linear-style deterministic init (weights stored as [in, out])
    w1 = jax.random.normal(k2, (dim, inner), jnp.float32) / jnp.sqrt(dim)
    b1 = jax.random.normal(k3, (inner,), jnp.float32) * 0.01
    w2 = jax.random.normal(k4, (hidden, dim), jnp.float32) / jnp.sqrt(hidden)
    b2 = jax.random.normal(k5, (dim,), jnp.float32) * 0.01

    out = jax.block_until_ready(feedforward_forward(x, w1, b1, w2, b2))
    assert out.shape == (batch, seq, dim)

    ref = jax.block_until_ready(reference_forward(x, w1, b1, w2, b2))
    # bf16 matmul operands vs f32 reference -> ~1e-2 scale tolerance.
    np.testing.assert_allclose(np.asarray(out), np.asarray(ref),
                               atol=2e-2, rtol=2e-2)

    print("KERNEL_OK")
</pallas_src>

<mosaic_0001>
module attributes {stable_mosaic.version = 11 : i64} {
  func.func @_ffn1_geglu_kernel(%arg0: i32, %arg1: i32, %arg2: i32, %arg3: memref<256x32xbf16, #tpu.memory_space<vmem>>, %arg4: memref<32x128xbf16, #tpu.memory_space<vmem>>, %arg5: memref<32x128xbf16, #tpu.memory_space<vmem>>, %arg6: memref<1x128xf32, #tpu.memory_space<vmem>>, %arg7: memref<1x128xf32, #tpu.memory_space<vmem>>, %arg8: memref<256x128xbf16, #tpu.memory_space<vmem>>, %arg9: memref<256x128xf32, #tpu.memory_space<vmem>>, %arg10: memref<256x128xf32, #tpu.memory_space<vmem>>) attributes {dimension_semantics = [#tpu.dimension_semantics<parallel>, #tpu.dimension_semantics<parallel>, #tpu.dimension_semantics<arbitrary>], iteration_bounds = array<i64: 1, 1, 1>, scalar_prefetch = 0 : i64, scratch_operands = 2 : i64, tpu.core_type = #tpu.core_type<tc>, window_params = [{transform_indices = @transform_0, window_bounds = array<i64: 256, 32>}, {transform_indices = @transform_1, window_bounds = array<i64: 32, 128>}, {transform_indices = @transform_2, window_bounds = array<i64: 32, 128>}, {transform_indices = @transform_3, window_bounds = array<i64: 1, 128>}, {transform_indices = @transform_4, window_bounds = array<i64: 1, 128>}, {transform_indices = @transform_5, window_bounds = array<i64: 256, 128>}]} {
    %c0_i32 = arith.constant 0 : i32
    %0 = arith.cmpi eq, %arg2, %c0_i32 : i32
    %1 = arith.extui %0 : i1 to i32
    %c0_i32_0 = arith.constant 0 : i32
    %2 = arith.cmpi ne, %1, %c0_i32_0 : i32
    scf.if %2 {
      %c0_17 = arith.constant 0 : index
      %c0_18 = arith.constant 0 : index
      %17 = vector.load %arg6[%c0_17, %c0_18] : memref<1x128xf32, #tpu.memory_space<vmem>>, vector<1x128xf32>
      %18 = vector.shape_cast %17 : vector<1x128xf32> to vector<1x128xf32>
      %19 = vector.broadcast %18 : vector<1x128xf32> to vector<256x128xf32>
      %c0_19 = arith.constant 0 : index
      %c0_20 = arith.constant 0 : index
      %20 = vector.load %arg9[%c0_19, %c0_20] : memref<256x128xf32, #tpu.memory_space<vmem>>, vector<256x128xf32>
      tpu.vector_store %arg9[%c0_19, %c0_20], %19 {strides = array<i32>} : memref<256x128xf32, #tpu.memory_space<vmem>>, vector<256x128xf32>,
      %c0_21 = arith.constant 0 : index
      %c0_22 = arith.constant 0 : index
      %21 = vector.load %arg7[%c0_21, %c0_22] : memref<1x128xf32, #tpu.memory_space<vmem>>, vector<1x128xf32>
      %22 = vector.shape_cast %21 : vector<1x128xf32> to vector<1x128xf32>
      %23 = vector.broadcast %22 : vector<1x128xf32> to vector<256x128xf32>
      %c0_23 = arith.constant 0 : index
      %c0_24 = arith.constant 0 : index
      %24 = vector.load %arg10[%c0_23, %c0_24] : memref<256x128xf32, #tpu.memory_space<vmem>>, vector<256x128xf32>
      tpu.vector_store %arg10[%c0_23, %c0_24], %23 {strides = array<i32>} : memref<256x128xf32, #tpu.memory_space<vmem>>, vector<256x128xf32>,
    } else {
    }
    %c0 = arith.constant 0 : index
    %c0_1 = arith.constant 0 : index
    %3 = vector.load %arg3[%c0, %c0_1] : memref<256x32xbf16, #tpu.memory_space<vmem>>, vector<256x32xbf16>
    %c0_2 = arith.constant 0 : index
    %c0_3 = arith.constant 0 : index
    %4 = vector.load %arg9[%c0_2, %c0_3] : memref<256x128xf32, #tpu.memory_space<vmem>>, vector<256x128xf32>
    %c0_4 = arith.constant 0 : index
    %c0_5 = arith.constant 0 : index
    %5 = vector.load %arg4[%c0_4, %c0_5] : memref<32x128xbf16, #tpu.memory_space<vmem>>, vector<32x128xbf16>
    %cst = arith.constant dense<0.000000e+00> : vector<256x128xf32>
    %6 = tpu.matmul %3, %5, %cst {dimension_numbers = #tpu.dot_dimension_numbers<[1], [0], [0], [1], [0, 0, 1, 1], [], []>} : vector<256x32xbf16>, vector<32x128xbf16>, vector<256x128xf32> -> vector<256x128xf32>
    %7 = arith.addf %4, %6 : vector<256x128xf32>
    %c0_6 = arith.constant 0 : index
    %c0_7 = arith.constant 0 : index
    %8 = vector.load %arg9[%c0_6, %c0_7] : memref<256x128xf32, #tpu.memory_space<vmem>>, vector<256x128xf32>
    tpu.vector_store %arg9[%c0_6, %c0_7], %7 {strides = array<i32>} : memref<256x128xf32, #tpu.memory_space<vmem>>, vector<256x128xf32>,
    %c0_8 = arith.constant 0 : index
    %c0_9 = arith.constant 0 : index
    %9 = vector.load %arg10[%c0_8, %c0_9] : memref<256x128xf32, #tpu.memory_space<vmem>>, vector<256x128xf32>
    %c0_10 = arith.constant 0 : index
    %c0_11 = arith.constant 0 : index
    %10 = vector.load %arg5[%c0_10, %c0_11] : memref<32x128xbf16, #tpu.memory_space<vmem>>, vector<32x128xbf16>
    %cst_12 = arith.constant dense<0.000000e+00> : vector<256x128xf32>
    %11 = tpu.matmul %3, %10, %cst_12 {dimension_numbers = #tpu.dot_dimension_numbers<[1], [0], [0], [1], [0, 0, 1, 1], [], []>} : vector<256x32xbf16>, vector<32x128xbf16>, vector<256x128xf32> -> vector<256x128xf32>
    %12 = arith.addf %9, %11 : vector<256x128xf32>
    %c0_13 = arith.constant 0 : index
    %c0_14 = arith.constant 0 : index
    %13 = vector.load %arg10[%c0_13, %c0_14] : memref<256x128xf32, #tpu.memory_space<vmem>>, vector<256x128xf32>
    tpu.vector_store %arg10[%c0_13, %c0_14], %12 {strides = array<i32>} : memref<256x128xf32, #tpu.memory_space<vmem>>, vector<256x128xf32>,
    %c0_i32_15 = arith.constant 0 : i32
    %14 = arith.cmpi eq, %arg2, %c0_i32_15 : i32
    %15 = arith.extui %14 : i1 to i32
    %c0_i32_16 = arith.constant 0 : i32
    %16 = arith.cmpi ne, %15, %c0_i32_16 : i32
    scf.if %16 {
      %c0_17 = arith.constant 0 : index
      %c0_18 = arith.constant 0 : index
      %17 = vector.load %arg9[%c0_17, %c0_18] : memref<256x128xf32, #tpu.memory_space<vmem>>, vector<256x128xf32>
      %c0_19 = arith.constant 0 : index
      %c0_20 = arith.constant 0 : index
      %18 = vector.load %arg10[%c0_19, %c0_20] : memref<256x128xf32, #tpu.memory_space<vmem>>, vector<256x128xf32>
      %cst_21 = arith.constant 5.000000e-01 : f32
      %19 = vector.broadcast %cst_21 : f32 to vector<256x128xf32>
      %20 = arith.mulf %19, %18 : vector<256x128xf32>
      %cst_22 = arith.constant 0.707106769 : f32
      %21 = vector.broadcast %cst_22 : f32 to vector<256x128xf32>
      %22 = arith.mulf %18, %21 : vector<256x128xf32>
      %23 = math.erf %22 : vector<256x128xf32>
      %cst_23 = arith.constant 1.000000e+00 : f32
      %24 = vector.broadcast %cst_23 : f32 to vector<256x128xf32>
      %25 = arith.addf %24, %23 : vector<256x128xf32>
      %26 = arith.mulf %20, %25 : vector<256x128xf32>
      %27 = arith.mulf %17, %26 : vector<256x128xf32>
      %28 = arith.truncf %27 : vector<256x128xf32> to vector<256x128xbf16>
      %c0_24 = arith.constant 0 : index
      %c0_25 = arith.constant 0 : index
      %29 = vector.load %arg8[%c0_24, %c0_25] : memref<256x128xbf16, #tpu.memory_space<vmem>>, vector<256x128xbf16>
      tpu.vector_store %arg8[%c0_24, %c0_25], %28 {strides = array<i32>} : memref<256x128xbf16, #tpu.memory_space<vmem>>, vector<256x128xbf16>,
    } else {
    }
    return
  }
  func.func @transform_0(%arg0: i32, %arg1: i32, %arg2: i32) -> (i32, i32) {
    %c0_i32 = arith.constant 0 : i32
    return %arg0, %arg2 : i32, i32
  }
  func.func @transform_1(%arg0: i32, %arg1: i32, %arg2: i32) -> (i32, i32) {
    %c0_i32 = arith.constant 0 : i32
    return %arg2, %arg1 : i32, i32
  }
  func.func @transform_2(%arg0: i32, %arg1: i32, %arg2: i32) -> (i32, i32) {
    %c1_i32 = arith.constant 1 : i32
    %0 = arith.addi %arg1, %c1_i32 : i32
    %c0_i32 = arith.constant 0 : i32
    return %arg2, %0 : i32, i32
  }
  func.func @transform_3(%arg0: i32, %arg1: i32, %arg2: i32) -> (i32, i32) {
    %c0_i32 = arith.constant 0 : i32
    %c0_i32_0 = arith.constant 0 : i32
    return %c0_i32, %arg1 : i32, i32
  }
  func.func @transform_4(%arg0: i32, %arg1: i32, %arg2: i32) -> (i32, i32) {
    %c1_i32 = arith.constant 1 : i32
    %0 = arith.addi %arg1, %c1_i32 : i32
    %c0_i32 = arith.constant 0 : i32
    %c0_i32_0 = arith.constant 0 : i32
    return %c0_i32, %0 : i32, i32
  }
  func.func @transform_5(%arg0: i32, %arg1: i32, %arg2: i32) -> (i32, i32) {
    %c0_i32 = arith.constant 0 : i32
    return %arg0, %arg1 : i32, i32
  }
}

</mosaic_0001>

<llo_original>
// kernel: tpu_custom_call.1
$region0: #{tpu_custom_call.1}
  #allocation0 [shape = 'u32[]', space=smem, size = 0x4, offset = 0x4, fixed_abs, tag = 'smem constant byte address 0x4 - core index']
  #allocation1 [shape = 'u32[72,128]{1,0:T(1,128)}', space=vmem, size = 0x9000, scoped, tag = 'internal scratch']
  #allocation2 [shape = 'f32[256,128]{1,0:T(8,128)}', space=vmem, size = 0x20000, scoped, tag = 'scratch operand']
  #allocation3 [shape = 'f32[256,128]{1,0:T(8,128)}', space=vmem, size = 0x20000, scoped, tag = 'scratch operand']
  %s0 = inlined_call_operand.vmem [shape: bf16[256,32], index: 0, kind: input, shape index: {}]
  %s1 = inlined_call_operand.vmem [shape: bf16[32,256], index: 1, kind: input, shape index: {}]
  %s2 = inlined_call_operand.vmem [shape: bf16[32,256], index: 2, kind: input, shape index: {}]
  %s3 = inlined_call_operand.vmem [shape: f32[1,256], index: 3, kind: input, shape index: {}]
  %s4 = inlined_call_operand.vmem [shape: f32[1,256], index: 4, kind: input, shape index: {}]
  %s5 = inlined_call_operand.hbm [shape: bf16[256,128], index: 5, kind: output, shape index: {}]
  %s6 = sld [smem:[#allocation0]]
  $region120: #{tpu_custom_call.1} parent=0
    _
  %s8 = ssub.s32 1, %s6
  %s9 = scalar_select 0, %s8, %s6
  $region1: #{tpu_custom_call.1} parent=0
    #allocation4 [shape = 'u8[8192]{0}', space=vmem, size = 0x2000, scoped, tag = 'input window, operand 1, single buffered']
    #allocation5 [shape = 'u8[8192]{0}', space=vmem, size = 0x2000, scoped, tag = 'input window, operand 2, single buffered']
    #allocation6 [shape = 'u8[65536]{0}', space=vmem, size = 0x10000, scoped, tag = 'output window, operand 0, single buffered']
    #allocation7 [shape = 's32[1]{0}', space=sflag, size = 0x4, scoped, tag = 'scoped memory for tpu_custom_call.1']
    %10 = vsyncpa [#allocation7], 0
    // Predicated region
    $region2: #{tpu_custom_call.1} parent=1 // pred_check
      _
    $region3: #{tpu_custom_call.1} parent=1 // pred_check_branch
      %12 = sbr.rel (0) target = $region5
    $region4: #{tpu_custom_call.1} parent=1 // pred_region
      _
    $region5: #{tpu_custom_call.1} parent=1 // pred_fallthru
      _
    // Predicated region
    $region6: #{tpu_custom_call.1} parent=1 // pred_check
      _
    $region7: #{tpu_custom_call.1} parent=1 // pred_check_branch
      %14 = sbr.rel (0) target = $region9
    $region8: #{tpu_custom_call.1} parent=1 // pred_region
      // Predicated region
      $region10: #{tpu_custom_call.1} parent=8 // pred_check
        _
      $region11: #{tpu_custom_call.1} parent=8 // pred_check_branch
        %16 = sbr.rel (0) target = $region13
      $region12: #{tpu_custom_call.1} parent=8 // pred_region
        // Predicated region
        $region14: #{tpu_custom_call.1} parent=12 // pred_check
          _
        $region15: #{tpu_custom_call.1} parent=12 // pred_check_branch
          %18 = sbr.rel target = $region17
        $region16: #{tpu_custom_call.1} parent=12 // pred_region
          // Predicated region
          $region29: #{tpu_custom_call.1} parent=16 // pred_check
            _
          $region30: #{tpu_custom_call.1} parent=16 // pred_check_branch
            %40 = sbr.rel (0) target = $region32
          $region31: #{tpu_custom_call.1} parent=16 // pred_region
            loop: start=0, step=1, limit=1
            $region33: #{tpu_custom_call.1} parent=31 // loop_pre_header
              _
            $region34: #{tpu_custom_call.1} parent=31 // loop_header
              %s42 = sphi 0, %s46
              %p43 = scmp.ge.s32.totalorder %s42, 1
              %s47 = sphi %s1, %s1
              %s48 = sphi [#allocation4], [#allocation4]
            $region35: #{tpu_custom_call.1} parent=31 // loop_header_branch
              %45 = sbr.rel (%p43) target = $region39
            $region36: #{tpu_custom_call.1} parent=31 // loop_body
              _
            $region37: #{tpu_custom_call.1} parent=31 // loop_footer
              %s46 = sadd.s32 1, %s42
            $region38: #{tpu_custom_call.1} parent=31 // loop_footer_branch
              %41 = sbr.rel target = $region34
            $region39: #{tpu_custom_call.1} parent=31 // loop_exit
              _
            %s50 = ssub.s32 16, 1
            loop: start=0, step=1, limit=1
            $region40: #{tpu_custom_call.1} parent=31 // loop_pre_header
              _
            $region41: #{tpu_custom_call.1} parent=31 // loop_header
              %s52 = sphi 0, %s56
              %p53 = scmp.ge.s32.totalorder %s52, 1
              %s57 = sphi %s1, %s1
              %s58 = sphi [#allocation4], [#allocation4]
            $region42: #{tpu_custom_call.1} parent=31 // loop_header_branch
              %55 = sbr.rel (%p53) target = $region46
            $region43: #{tpu_custom_call.1} parent=31 // loop_body
              %v59 = vld [vmem:[%s57] sm:%s50]
              %60 = vst [vmem:[%s58] sm:%s50] %v59
              %v61 = vld [vmem:[%s57 + $0x8] sm:%s50]
              %62 = vst [vmem:[%s58 + $0x4] sm:%s50] %v61
              %v63 = vld [vmem:[%s57 + $0x10] sm:%s50]
              %64 = vst [vmem:[%s58 + $0x8] sm:%s50] %v63
              %v65 = vld [vmem:[%s57 + $0x18] sm:%s50]
              %66 = vst [vmem:[%s58 + $0xc] sm:%s50] %v65
            $region44: #{tpu_custom_call.1} parent=31 // loop_footer
              %s56 = sadd.s32 1, %s52
            $region45: #{tpu_custom_call.1} parent=31 // loop_footer_branch
              %51 = sbr.rel target = $region41
            $region46: #{tpu_custom_call.1} parent=31 // loop_exit
              _
          $region32: #{tpu_custom_call.1} parent=16 // pred_fallthru
            _
        $region17: #{tpu_custom_call.1} parent=12 // pred_fallthru
          _
        // Predicated region
        $region18: #{tpu_custom_call.1} parent=12 // pred_check
          _
        $region19: #{tpu_custom_call.1} parent=12 // pred_check_branch
          %20 = sbr.rel (0) target = $region21
        $region20: #{tpu_custom_call.1} parent=12 // pred_region
          %s22 = ssub.s32 16, 1
          loop: start=0, step=1, limit=1
          $region22: #{tpu_custom_call.1} parent=20 // loop_pre_header
            _
          $region23: #{tpu_custom_call.1} parent=20 // loop_header
            %s24 = sphi 0, %s28
            %p25 = scmp.ge.s32.totalorder %s24, 1
            %s29 = sphi %s1, %s1
            %s30 = sphi [#allocation4], [#allocation4]
          $region24: #{tpu_custom_call.1} parent=20 // loop_header_branch
            %27 = sbr.rel (%p25) target = $region28
          $region25: #{tpu_custom_call.1} parent=20 // loop_body
            %v31 = vld [vmem:[%s29] sm:%s22]
            %32 = vst [vmem:[%s30] sm:%s22] %v31
            %v33 = vld [vmem:[%s29 + $0x8] sm:%s22]
            %34 = vst [vmem:[%s30 + $0x4] sm:%s22] %v33
            %v35 = vld [vmem:[%s29 + $0x10] sm:%s22]
            %36 = vst [vmem:[%s30 + $0x8] sm:%s22] %v35
            %v37 = vld [vmem:[%s29 + $0x18] sm:%s22]
            %38 = vst [vmem:[%s30 + $0xc] sm:%s22] %v37
          $region26: #{tpu_custom_call.1} parent=20 // loop_footer
            %s28 = sadd.s32 1, %s24
          $region27: #{tpu_custom_call.1} parent=20 // loop_footer_branch
            %23 = sbr.rel target = $region23
          $region28: #{tpu_custom_call.1} parent=20 // loop_exit
            _
        $region21: #{tpu_custom_call.1} parent=12 // pred_fallthru
          _
      $region13: #{tpu_custom_call.1} parent=8 // pred_fallthru
        _
      %67 = vnop
    $region9: #{tpu_custom_call.1} parent=1 // pred_fallthru
      _
    // Predicated region
    $region47: #{tpu_custom_call.1} parent=1 // pred_check
      _
    $region48: #{tpu_custom_call.1} parent=1 // pred_check_branch
      %69 = sbr.rel (0) target = $region50
    $region49: #{tpu_custom_call.1} parent=1 // pred_region
      %s70 = sadd.s32 0, 1
      %s71 = smul.addr %s70, 4
      %s72 = scalar_lea.vmem %s2, %s71
      // Predicated region
      $region51: #{tpu_custom_call.1} parent=49 // pred_check
        _
      $region52: #{tpu_custom_call.1} parent=49 // pred_check_branch
        %74 = sbr.rel (0) target = $region54
      $region53: #{tpu_custom_call.1} parent=49 // pred_region
        // Predicated region
        $region55: #{tpu_custom_call.1} parent=53 // pred_check
          _
        $region56: #{tpu_custom_call.1} parent=53 // pred_check_branch
          %76 = sbr.rel target = $region58
        $region57: #{tpu_custom_call.1} parent=53 // pred_region
          // Predicated region
          $region70: #{tpu_custom_call.1} parent=57 // pred_check
            _
          $region71: #{tpu_custom_call.1} parent=57 // pred_check_branch
            %98 = sbr.rel (0) target = $region73
          $region72: #{tpu_custom_call.1} parent=57 // pred_region
            loop: start=0, step=1, limit=1
            $region74: #{tpu_custom_call.1} parent=72 // loop_pre_header
              _
            $region75: #{tpu_custom_call.1} parent=72 // loop_header
              %s100 = sphi 0, %s104
              %p101 = scmp.ge.s32.totalorder %s100, 1
              %s105 = sphi %s72, %s72
              %s106 = sphi [#allocation5], [#allocation5]
            $region76: #{tpu_custom_call.1} parent=72 // loop_header_branch
              %103 = sbr.rel (%p101) target = $region80
            $region77: #{tpu_custom_call.1} parent=72 // loop_body
              _
            $region78: #{tpu_custom_call.1} parent=72 // loop_footer
              %s104 = sadd.s32 1, %s100
            $region79: #{tpu_custom_call.1} parent=72 // loop_footer_branch
              %99 = sbr.rel target = $region75
            $region80: #{tpu_custom_call.1} parent=72 // loop_exit
              _
            %s108 = ssub.s32 16, 1
            loop: start=0, step=1, limit=1
            $region81: #{tpu_custom_call.1} parent=72 // loop_pre_header
              _
            $region82: #{tpu_custom_call.1} parent=72 // loop_header
              %s110 = sphi 0, %s114
              %p111 = scmp.ge.s32.totalorder %s110, 1
              %s115 = sphi %s72, %s72
              %s116 = sphi [#allocation5], [#allocation5]
            $region83: #{tpu_custom_call.1} parent=72 // loop_header_branch
              %113 = sbr.rel (%p111) target = $region87
            $region84: #{tpu_custom_call.1} parent=72 // loop_body
              %v117 = vld [vmem:[%s115] sm:%s108]
              %118 = vst [vmem:[%s116] sm:%s108] %v117
              %v119 = vld [vmem:[%s115 + $0x8] sm:%s108]
              %120 = vst [vmem:[%s116 + $0x4] sm:%s108] %v119
              %v121 = vld [vmem:[%s115 + $0x10] sm:%s108]
              %122 = vst [vmem:[%s116 + $0x8] sm:%s108] %v121
              %v123 = vld [vmem:[%s115 + $0x18] sm:%s108]
              %124 = vst [vmem:[%s116 + $0xc] sm:%s108] %v123
            $region85: #{tpu_custom_call.1} parent=72 // loop_footer
              %s114 = sadd.s32 1, %s110
            $region86: #{tpu_custom_call.1} parent=72 // loop_footer_branch
              %109 = sbr.rel target = $region82
            $region87: #{tpu_custom_call.1} parent=72 // loop_exit
              _
          $region73: #{tpu_custom_call.1} parent=57 // pred_fallthru
            _
        $region58: #{tpu_custom_call.1} parent=53 // pred_fallthru
          _
        // Predicated region
        $region59: #{tpu_custom_call.1} parent=53 // pred_check
          _
        $region60: #{tpu_custom_call.1} parent=53 // pred_check_branch
          %78 = sbr.rel (0) target = $region62
        $region61: #{tpu_custom_call.1} parent=53 // pred_region
          %s80 = ssub.s32 16, 1
          loop: start=0, step=1, limit=1
          $region63: #{tpu_custom_call.1} parent=61 // loop_pre_header
            _
          $region64: #{tpu_custom_call.1} parent=61 // loop_header
            %s82 = sphi 0, %s86
            %p83 = scmp.ge.s32.totalorder %s82, 1
            %s87 = sphi %s72, %s72
            %s88 = sphi [#allocation5], [#allocation5]
          $region65: #{tpu_custom_call.1} parent=61 // loop_header_branch
            %85 = sbr.rel (%p83) target = $region69
          $region66: #{tpu_custom_call.1} parent=61 // loop_body
            %v89 = vld [vmem:[%s87] sm:%s80]
            %90 = vst [vmem:[%s88] sm:%s80] %v89
            %v91 = vld [vmem:[%s87 + $0x8] sm:%s80]
            %92 = vst [vmem:[%s88 + $0x4] sm:%s80] %v91
            %v93 = vld [vmem:[%s87 + $0x10] sm:%s80]
            %94 = vst [vmem:[%s88 + $0x8] sm:%s80] %v93
            %v95 = vld [vmem:[%s87 + $0x18] sm:%s80]
            %96 = vst [vmem:[%s88 + $0xc] sm:%s80] %v95
          $region67: #{tpu_custom_call.1} parent=61 // loop_footer
            %s86 = sadd.s32 1, %s82
          $region68: #{tpu_custom_call.1} parent=61 // loop_footer_branch
            %81 = sbr.rel target = $region64
          $region69: #{tpu_custom_call.1} parent=61 // loop_exit
            _
        $region62: #{tpu_custom_call.1} parent=53 // pred_fallthru
          _
      $region54: #{tpu_custom_call.1} parent=49 // pred_fallthru
        _
      %125 = vnop
    $region50: #{tpu_custom_call.1} parent=1 // pred_fallthru
      _
    // Predicated region
    $region88: #{tpu_custom_call.1} parent=1 // pred_check
      _
    $region89: #{tpu_custom_call.1} parent=1 // pred_check_branch
      %127 = sbr.rel (0) target = $region91
    $region90: #{tpu_custom_call.1} parent=1 // pred_region
      _
    $region91: #{tpu_custom_call.1} parent=1 // pred_fallthru
      _
    // Predicated region
    $region92: #{tpu_custom_call.1} parent=1 // pred_check
      _
    $region93: #{tpu_custom_call.1} parent=1 // pred_check_branch
      %129 = sbr.rel (0) target = $region95
    $region94: #{tpu_custom_call.1} parent=1 // pred_region
      %s130 = sadd.s32 0, 1
      %p131 = scmp.lt.s32.totalorder %s130, 1
      %s132 = scalar_select %p131, %s130, 1
      %s133 = scalar_lea.vmem %s4, %s132
      %s134 = sadd.s32 0, 1
    $region95: #{tpu_custom_call.1} parent=1 // pred_fallthru
      _
    // Predicated region
    $region96: #{tpu_custom_call.1} parent=1 // pred_check
      _
    $region97: #{tpu_custom_call.1} parent=1 // pred_check_branch
      %136 = sbr.rel (0) target = $region99
    $region98: #{tpu_custom_call.1} parent=1 // pred_region
      _
    $region99: #{tpu_custom_call.1} parent=1 // pred_fallthru
      _
    // Predicated region
    $region100: #{tpu_custom_call.1} parent=1 // pred_check
      _
    $region101: #{tpu_custom_call.1} parent=1 // pred_check_branch
      %138 = sbr.rel (0) target = $region103
    $region102: #{tpu_custom_call.1} parent=1 // pred_region
      _
    $region103: #{tpu_custom_call.1} parent=1 // pred_fallthru
      _
    %s139 = sadd.s32 0, 1
    %p140 = scmp.lt.s32.totalorder %s139, 1
    %s141 = scalar_select %p140, %s139, 1
    %s142 = scalar_lea.vmem %s4, %s141
    %s143 = sadd.s32 0, 1
    %s144 = sadd.s32 0, 1
    %p145 = scmp.lt.s32.totalorder %s144, 1
    %s146 = scalar_select %p145, %s144, 1
    %s147 = scalar_lea.vmem %s4, %s146
    %s148 = sadd.s32 0, 1
    %p150 = scmp.eq.s32.totalorder 0, 0
    // Predicated region
    $region104: #{tpu_custom_call.1} parent=1 // pred_check
      %p151 = pneg %p150
    $region105: #{tpu_custom_call.1} parent=1 // pred_check_branch
      %153 = sbr.rel (%p151) target = $region107
    $region106: #{tpu_custom_call.1} parent=1 // pred_region
      %v154 = vld [vmem:[%s3] sm:$0x1]
      %v156 = vperm.slane %v154, 0
      %158 = vst [vmem:[#allocation2] sm:$0xff] %v156
      %159 = vst [vmem:[#allocation2 + $0x8] sm:$0xff] %v156
      %160 = vst [vmem:[#allocation2 + $0x10] sm:$0xff] %v156
      %161 = vst [vmem:[#allocation2 + $0x18] sm:$0xff] %v156
      %162 = vst [vmem:[#allocation2 + $0x20] sm:$0xff] %v156
      %163 = vst [vmem:[#allocation2 + $0x28] sm:$0xff] %v156
      %164 = vst [vmem:[#allocation2 + $0x30] sm:$0xff] %v156
      %165 = vst [vmem:[#allocation2 + $0x38] sm:$0xff] %v156
      %166 = vst [vmem:[#allocation2 + $0x40] sm:$0xff] %v156
      %167 = vst [vmem:[#allocation2 + $0x48] sm:$0xff] %v156
      %168 = vst [vmem:[#allocation2 + $0x50] sm:$0xff] %v156
      %169 = vst [vmem:[#allocation2 + $0x58] sm:$0xff] %v156
      %170 = vst [vmem:[#allocation2 + $0x60] sm:$0xff] %v156
      %171 = vst [vmem:[#allocation2 + $0x68] sm:$0xff] %v156
      %172 = vst [vmem:[#allocation2 + $0x70] sm:$0xff] %v156
      %173 = vst [vmem:[#allocation2 + $0x78] sm:$0xff] %v156
      %174 = vst [vmem:[#allocation2 + $0x80] sm:$0xff] %v156
      %175 = vst [vmem:[#allocation2 + $0x88] sm:$0xff] %v156
      %176 = vst [vmem:[#allocation2 + $0x90] sm:$0xff] %v156
      %177 = vst [vmem:[#allocation2 + $0x98] sm:$0xff] %v156
      %178 = vst [vmem:[#allocation2 + $0xa0] sm:$0xff] %v156
      %179 = vst [vmem:[#allocation2 + $0xa8] sm:$0xff] %v156
      %180 = vst [vmem:[#allocation2 + $0xb0] sm:$0xff] %v156
      %181 = vst [vmem:[#allocation2 + $0xb8] sm:$0xff] %v156
      %182 = vst [vmem:[#allocation2 + $0xc0] sm:$0xff] %v156
      %183 = vst [vmem:[#allocation2 + $0xc8] sm:$0xff] %v156
      %184 = vst [vmem:[#allocation2 + $0xd0] sm:$0xff] %v156
      %185 = vst [vmem:[#allocation2 + $0xd8] sm:$0xff] %v156
      %186 = vst [vmem:[#allocation2 + $0xe0] sm:$0xff] %v156
      %187 = vst [vmem:[#allocation2 + $0xe8] sm:$0xff] %v156
      %188 = vst [vmem:[#allocation2 + $0xf0] sm:$0xff] %v156
      %189 = vst [vmem:[#allocation2 + $0xf8] sm:$0xff] %v156
      %v190 = vld [vmem:[%s147] sm:$0x1]
      %v192 = vperm.slane %v190, 0
      %194 = vst [vmem:[#allocation3] sm:$0xff] %v192
      %195 = vst [vmem:[#allocation3 + $0x8] sm:$0xff] %v192
      %196 = vst [vmem:[#allocation3 + $0x10] sm:$0xff] %v192
      %197 = vst [vmem:[#allocation3 + $0x18] sm:$0xff] %v192
      %198 = vst [vmem:[#allocation3 + $0x20] sm:$0xff] %v192
      %199 = vst [vmem:[#allocation3 + $0x28] sm:$0xff] %v192
      %200 = vst [vmem:[#allocation3 + $0x30] sm:$0xff] %v192
      %201 = vst [vmem:[#allocation3 + $0x38] sm:$0xff] %v192
      %202 = vst [vmem:[#allocation3 + $0x40] sm:$0xff] %v192
      %203 = vst [vmem:[#allocation3 + $0x48] sm:$0xff] %v192
      %204 = vst [vmem:[#allocation3 + $0x50] sm:$0xff] %v192
      %205 = vst [vmem:[#allocation3 + $0x58] sm:$0xff] %v192
      %206 = vst [vmem:[#allocation3 + $0x60] sm:$0xff] %v192
      %207 = vst [vmem:[#allocation3 + $0x68] sm:$0xff] %v192
      %208 = vst [vmem:[#allocation3 + $0x70] sm:$0xff] %v192
      %209 = vst [vmem:[#allocation3 + $0x78] sm:$0xff] %v192
      %210 = vst [vmem:[#allocation3 + $0x80] sm:$0xff] %v192
      %211 = vst [vmem:[#allocation3 + $0x88] sm:$0xff] %v192
      %212 = vst [vmem:[#allocation3 + $0x90] sm:$0xff] %v192
      %213 = vst [vmem:[#allocation3 + $0x98] sm:$0xff] %v192
      %214 = vst [vmem:[#allocation3 + $0xa0] sm:$0xff] %v192
      %215 = vst [vmem:[#allocation3 + $0xa8] sm:$0xff] %v192
      %216 = vst [vmem:[#allocation3 + $0xb0] sm:$0xff] %v192
      %217 = vst [vmem:[#allocation3 + $0xb8] sm:$0xff] %v192
      %218 = vst [vmem:[#allocation3 + $0xc0] sm:$0xff] %v192
      %219 = vst [vmem:[#allocation3 + $0xc8] sm:$0xff] %v192
      %220 = vst [vmem:[#allocation3 + $0xd0] sm:$0xff] %v192
      %221 = vst [vmem:[#allocation3 + $0xd8] sm:$0xff] %v192
      %222 = vst [vmem:[#allocation3 + $0xe0] sm:$0xff] %v192
      %223 = vst [vmem:[#allocation3 + $0xe8] sm:$0xff] %v192
      %224 = vst [vmem:[#allocation3 + $0xf0] sm:$0xff] %v192
      %225 = vst [vmem:[#allocation3 + $0xf8] sm:$0xff] %v192
    $region107: #{tpu_custom_call.1} parent=1 // pred_fallthru
      _
    %v226 = vld [vmem:[%s0] sm:$0xf]
    %v227 = vld [vmem:[%s0 + $0x4] sm:$0xf]
    %v228 = vld [vmem:[%s0 + $0x8] sm:$0xf]
    %v229 = vld [vmem:[%s0 + $0xc] sm:$0xf]
    %v230 = vld [vmem:[%s0 + $0x10] sm:$0xf]
    %v231 = vld [vmem:[%s0 + $0x14] sm:$0xf]
    %v232 = vld [vmem:[%s0 + $0x18] sm:$0xf]
    %v233 = vld [vmem:[%s0 + $0x1c] sm:$0xf]
    %v234 = vld [vmem:[%s0 + $0x20] sm:$0xf]
    %v235 = vld [vmem:[%s0 + $0x24] sm:$0xf]
    %v236 = vld [vmem:[%s0 + $0x28] sm:$0xf]
    %v237 = vld [vmem:[%s0 + $0x2c] sm:$0xf]
    %v238 = vld [vmem:[%s0 + $0x30] sm:$0xf]
    %v239 = vld [vmem:[%s0 + $0x34] sm:$0xf]
    %v240 = vld [vmem:[%s0 + $0x38] sm:$0xf]
    %v241 = vld [vmem:[%s0 + $0x3c] sm:$0xf]
    %v242 = vld [vmem:[%s0 + $0x40] sm:$0xf]
    %v243 = vld [vmem:[%s0 + $0x44] sm:$0xf]
    %v244 = vld [vmem:[%s0 + $0x48] sm:$0xf]
    %v245 = vld [vmem:[%s0 + $0x4c] sm:$0xf]
    %v246 = vld [vmem:[%s0 + $0x50] sm:$0xf]
    %v247 = vld [vmem:[%s0 + $0x54] sm:$0xf]
    %v248 = vld [vmem:[%s0 + $0x58] sm:$0xf]
    %v249 = vld [vmem:[%s0 + $0x5c] sm:$0xf]
    %v250 = vld [vmem:[%s0 + $0x60] sm:$0xf]
    %v251 = vld [vmem:[%s0 + $0x64] sm:$0xf]
    %v252 = vld [vmem:[%s0 + $0x68] sm:$0xf]
    %v253 = vld [vmem:[%s0 + $0x6c] sm:$0xf]
    %v254 = vld [vmem:[%s0 + $0x70] sm:$0xf]
    %v255 = vld [vmem:[%s0 + $0x74] sm:$0xf]
    %v256 = vld [vmem:[%s0 + $0x78] sm:$0xf]
    %v257 = vld [vmem:[%s0 + $0x7c] sm:$0xf]
    %v258 = vld [vmem:[#allocation2] sm:$0xff]
    %v259 = vld [vmem:[#allocation2 + $0x8] sm:$0xff]
    %v260 = vld [vmem:[#allocation2 + $0x10] sm:$0xff]
    %v261 = vld [vmem:[#allocation2 + $0x18] sm:$0xff]
    %v262 = vld [vmem:[#allocation2 + $0x20] sm:$0xff]
    %v263 = vld [vmem:[#allocation2 + $0x28] sm:$0xff]
    %v264 = vld [vmem:[#allocation2 + $0x30] sm:$0xff]
    %v265 = vld [vmem:[#allocation2 + $0x38] sm:$0xff]
    %v266 = vld [vmem:[#allocation2 + $0x40] sm:$0xff]
    %v267 = vld [vmem:[#allocation2 + $0x48] sm:$0xff]
    %v268 = vld [vmem:[#allocation2 + $0x50] sm:$0xff]
    %v269 = vld [vmem:[#allocation2 + $0x58] sm:$0xff]
    %v270 = vld [vmem:[#allocation2 + $0x60] sm:$0xff]
    %v271 = vld [vmem:[#allocation2 + $0x68] sm:$0xff]
    %v272 = vld [vmem:[#allocation2 + $0x70] sm:$0xff]
    %v273 = vld [vmem:[#allocation2 + $0x78] sm:$0xff]
    %v274 = vld [vmem:[#allocation2 + $0x80] sm:$0xff]
    %v275 = vld [vmem:[#allocation2 + $0x88] sm:$0xff]
    %v276 = vld [vmem:[#allocation2 + $0x90] sm:$0xff]
    %v277 = vld [vmem:[#allocation2 + $0x98] sm:$0xff]
    %v278 = vld [vmem:[#allocation2 + $0xa0] sm:$0xff]
    %v279 = vld [vmem:[#allocation2 + $0xa8] sm:$0xff]
    %v280 = vld [vmem:[#allocation2 + $0xb0] sm:$0xff]
    %v281 = vld [vmem:[#allocation2 + $0xb8] sm:$0xff]
    %v282 = vld [vmem:[#allocation2 + $0xc0] sm:$0xff]
    %v283 = vld [vmem:[#allocation2 + $0xc8] sm:$0xff]
    %v284 = vld [vmem:[#allocation2 + $0xd0] sm:$0xff]
    %v285 = vld [vmem:[#allocation2 + $0xd8] sm:$0xff]
    %v286 = vld [vmem:[#allocation2 + $0xe0] sm:$0xff]
    %v287 = vld [vmem:[#allocation2 + $0xe8] sm:$0xff]
    %v288 = vld [vmem:[#allocation2 + $0xf0] sm:$0xff]
    %v289 = vld [vmem:[#allocation2 + $0xf8] sm:$0xff]
    %v290 = vld [vmem:[#allocation4] sm:$0xf]
    %v291 = vld [vmem:[#allocation4 + $0x4] sm:$0xf]
    %v292 = vld [vmem:[#allocation4 + $0x8] sm:$0xf]
    %v293 = vld [vmem:[#allocation4 + $0xc] sm:$0xf]
    %v326 = vunpack.c.l.b16 %v226
    %v327 = vunpack.c.l.b16 %v227
    %v328 = vunpack.c.l.b16 %v228
    %v329 = vunpack.c.l.b16 %v229
    %v330 = vunpack.c.l.b16 %v230
    %v331 = vunpack.c.l.b16 %v231
    %v332 = vunpack.c.l.b16 %v232
    %v333 = vunpack.c.l.b16 %v233
    %v334 = vunpack.c.l.b16 %v234
    %v335 = vunpack.c.l.b16 %v235
    %v336 = vunpack.c.l.b16 %v236
    %v337 = vunpack.c.l.b16 %v237
    %v338 = vunpack.c.l.b16 %v238
    %v339 = vunpack.c.l.b16 %v239
    %v340 = vunpack.c.l.b16 %v240
    %v341 = vunpack.c.l.b16 %v241
    %v342 = vunpack.c.l.b16 %v242
    %v343 = vunpack.c.l.b16 %v243
    %v344 = vunpack.c.l.b16 %v244
    %v345 = vunpack.c.l.b16 %v245
    %v346 = vunpack.c.l.b16 %v246
    %v347 = vunpack.c.l.b16 %v247
    %v348 = vunpack.c.l.b16 %v248
    %v349 = vunpack.c.l.b16 %v249
    %v350 = vunpack.c.l.b16 %v250
    %v351 = vunpack.c.l.b16 %v251
    %v352 = vunpack.c.l.b16 %v252
    %v353 = vunpack.c.l.b16 %v253
    %v354 = vunpack.c.l.b16 %v254
    %v355 = vunpack.c.l.b16 %v255
    %v356 = vunpack.c.l.b16 %v256
    %v357 = vunpack.c.l.b16 %v257
    %v358 = vpack.c.b16 %v327, %v326
    %v359 = vpack.c.b16 %v329, %v328
    %v360 = vpack.c.b16 %v331, %v330
    %v361 = vpack.c.b16 %v333, %v332
    %v362 = vpack.c.b16 %v335, %v334
    %v363 = vpack.c.b16 %v337, %v336
    %v364 = vpack.c.b16 %v339, %v338
    %v365 = vpack.c.b16 %v341, %v340
    %v366 = vpack.c.b16 %v343, %v342
    %v367 = vpack.c.b16 %v345, %v344
    %v368 = vpack.c.b16 %v347, %v346
    %v369 = vpack.c.b16 %v349, %v348
    %v370 = vpack.c.b16 %v351, %v350
    %v371 = vpack.c.b16 %v353, %v352
    %v372 = vpack.c.b16 %v355, %v354
    %v373 = vpack.c.b16 %v357, %v356
    %v378 = vunpack.c.l.b16 %v290
    %v379 = vunpack.c.l.b16 %v291
    %v380 = vunpack.c.l.b16 %v292
    %v381 = vunpack.c.l.b16 %v293
    %v382 = vpack.c.b16 %v379, %v378
    %v383 = vpack.c.b16 %v381, %v380
    %vm386 = vcmask 261120
    %v388 = vsel %vm386, %v358, 0
    %v391 = vsel %vm386, %v359, 0
    %v394 = vsel %vm386, %v360, 0
    %v397 = vsel %vm386, %v361, 0
    %v400 = vsel %vm386, %v362, 0
    %v403 = vsel %vm386, %v363, 0
    %v406 = vsel %vm386, %v364, 0
    %v409 = vsel %vm386, %v365, 0
    %v412 = vsel %vm386, %v366, 0
    %v415 = vsel %vm386, %v367, 0
    %v418 = vsel %vm386, %v368, 0
    %v421 = vsel %vm386, %v369, 0
    %v424 = vsel %vm386, %v370, 0
    %v427 = vsel %vm386, %v371, 0
    %v430 = vsel %vm386, %v372, 0
    %v433 = vsel %vm386, %v373, 0
    %435 = vmatpush.bf16.msra.mxu0 0
    %436 = vmatpush.bf16.msra.mxu0 0
    %437 = vmatpush.bf16.msra.mxu0 0
    %438 = vmatpush.bf16.msra.mxu0 0
    %439 = vmatpush.bf16.msra.mxu0 0
    %440 = vmatpush.bf16.msra.mxu0 0
    %441 = vmatpush.bf16.msra.mxu0 %v383
    %442 = vmatpush.bf16.msra.mxu0 %v382
    %443 = vmatmul.bf16.gmra.mxu0 %v388
    %v444 = vpop.f32.mrf.mxu0
    %v445 = vadd.f32 0.0, %v444
    %v446 = vpop.f32.mrf.mxu0
    %v447 = vadd.f32 0.0, %v446
    %448 = vmatmul.bf16.gmra.mxu0 %v391
    %v449 = vpop.f32.mrf.mxu0
    %v450 = vadd.f32 0.0, %v449
    %v451 = vpop.f32.mrf.mxu0
    %v452 = vadd.f32 0.0, %v451
    %453 = vmatmul.bf16.gmra.mxu0 %v394
    %v454 = vpop.f32.mrf.mxu0
    %v455 = vadd.f32 0.0, %v454
    %v456 = vpop.f32.mrf.mxu0
    %v457 = vadd.f32 0.0, %v456
    %458 = vmatmul.bf16.gmra.mxu0 %v397
    %v459 = vpop.f32.mrf.mxu0
    %v460 = vadd.f32 0.0, %v459
    %v461 = vpop.f32.mrf.mxu0
    %v462 = vadd.f32 0.0, %v461
    %463 = vmatmul.bf16.gmra.mxu0 %v400
    %v464 = vpop.f32.mrf.mxu0
    %v465 = vadd.f32 0.0, %v464
    %v466 = vpop.f32.mrf.mxu0
    %v467 = vadd.f32 0.0, %v466
    %468 = vmatmul.bf16.gmra.mxu0 %v403
    %v469 = vpop.f32.mrf.mxu0
    %v470 = vadd.f32 0.0, %v469
    %v471 = vpop.f32.mrf.mxu0
    %v472 = vadd.f32 0.0, %v471
    %473 = vmatmul.bf16.gmra.mxu0 %v406
    %v474 = vpop.f32.mrf.mxu0
    %v475 = vadd.f32 0.0, %v474
    %v476 = vpop.f32.mrf.mxu0
    %v477 = vadd.f32 0.0, %v476
    %478 = vmatmul.bf16.gmra.mxu0 %v409
    %v479 = vpop.f32.mrf.mxu0
    %v480 = vadd.f32 0.0, %v479
    %v481 = vpop.f32.mrf.mxu0
    %v482 = vadd.f32 0.0, %v481
    %483 = vmatmul.bf16.gmra.mxu0 %v412
    %v484 = vpop.f32.mrf.mxu0
    %v485 = vadd.f32 0.0, %v484
    %v486 = vpop.f32.mrf.mxu0
    %v487 = vadd.f32 0.0, %v486
    %488 = vmatmul.bf16.gmra.mxu0 %v415
    %v489 = vpop.f32.mrf.mxu0
    %v490 = vadd.f32 0.0, %v489
    %v491 = vpop.f32.mrf.mxu0
    %v492 = vadd.f32 0.0, %v491
    %493 = vmatmul.bf16.gmra.mxu0 %v418
    %v494 = vpop.f32.mrf.mxu0
    %v495 = vadd.f32 0.0, %v494
    %v496 = vpop.f32.mrf.mxu0
    %v497 = vadd.f32 0.0, %v496
    %498 = vmatmul.bf16.gmra.mxu0 %v421
    %v499 = vpop.f32.mrf.mxu0
    %v500 = vadd.f32 0.0, %v499
    %v501 = vpop.f32.mrf.mxu0
    %v502 = vadd.f32 0.0, %v501
    %503 = vmatmul.bf16.gmra.mxu0 %v424
    %v504 = vpop.f32.mrf.mxu0
    %v505 = vadd.f32 0.0, %v504
    %v506 = vpop.f32.mrf.mxu0
    %v507 = vadd.f32 0.0, %v506
    %508 = vmatmul.bf16.gmra.mxu0 %v427
    %v509 = vpop.f32.mrf.mxu0
    %v510 = vadd.f32 0.0, %v509
    %v511 = vpop.f32.mrf.mxu0
    %v512 = vadd.f32 0.0, %v511
    %513 = vmatmul.bf16.gmra.mxu0 %v430
    %v514 = vpop.f32.mrf.mxu0
    %v515 = vadd.f32 0.0, %v514
    %v516 = vpop.f32.mrf.mxu0
    %v517 = vadd.f32 0.0, %v516
    %518 = vmatmul.bf16.gmra.mxu0 %v433
    %v519 = vpop.f32.mrf.mxu0
    %v520 = vadd.f32 0.0, %v519
    %v521 = vpop.f32.mrf.mxu0
    %v522 = vadd.f32 0.0, %v521
    %523 = vdwg.mxu0
    %v524 = vadd.f32 %v258, %v445
    %v525 = vadd.f32 %v259, %v447
    %v526 = vadd.f32 %v260, %v450
    %v527 = vadd.f32 %v261, %v452
    %v528 = vadd.f32 %v262, %v455
    %v529 = vadd.f32 %v263, %v457
    %v530 = vadd.f32 %v264, %v460
    %v531 = vadd.f32 %v265, %v462
    %v532 = vadd.f32 %v266, %v465
    %v533 = vadd.f32 %v267, %v467
    %v534 = vadd.f32 %v268, %v470
    %v535 = vadd.f32 %v269, %v472
    %v536 = vadd.f32 %v270, %v475
    %v537 = vadd.f32 %v271, %v477
    %v538 = vadd.f32 %v272, %v480
    %v539 = vadd.f32 %v273, %v482
    %v540 = vadd.f32 %v274, %v485
    %v541 = vadd.f32 %v275, %v487
    %v542 = vadd.f32 %v276, %v490
    %v543 = vadd.f32 %v277, %v492
    %v544 = vadd.f32 %v278, %v495
    %v545 = vadd.f32 %v279, %v497
    %v546 = vadd.f32 %v280, %v500
    %v547 = vadd.f32 %v281, %v502
    %v548 = vadd.f32 %v282, %v505
    %v549 = vadd.f32 %v283, %v507
    %v550 = vadd.f32 %v284, %v510
    %v551 = vadd.f32 %v285, %v512
    %v552 = vadd.f32 %v286, %v515
    %v553 = vadd.f32 %v287, %v517
    %v554 = vadd.f32 %v288, %v520
    %v555 = vadd.f32 %v289, %v522
    %556 = vst [vmem:[#allocation2] sm:$0xff] %v524
    %557 = vst [vmem:[#allocation2 + $0x8] sm:$0xff] %v525
    %558 = vst [vmem:[#allocation2 + $0x10] sm:$0xff] %v526
    %559 = vst [vmem:[#allocation2 + $0x18] sm:$0xff] %v527
    %560 = vst [vmem:[#allocation2 + $0x20] sm:$0xff] %v528
    %561 = vst [vmem:[#allocation2 + $0x28] sm:$0xff] %v529
    %562 = vst [vmem:[#allocation2 + $0x30] sm:$0xff] %v530
    %563 = vst [vmem:[#allocation2 + $0x38] sm:$0xff] %v531
    %564 = vst [vmem:[#allocation2 + $0x40] sm:$0xff] %v532
    %565 = vst [vmem:[#allocation2 + $0x48] sm:$0xff] %v533
    %566 = vst [vmem:[#allocation2 + $0x50] sm:$0xff] %v534
    %567 = vst [vmem:[#allocation2 + $0x58] sm:$0xff] %v535
    %568 = vst [vmem:[#allocation2 + $0x60] sm:$0xff] %v536
    %569 = vst [vmem:[#allocation2 + $0x68] sm:$0xff] %v537
    %570 = vst [vmem:[#allocation2 + $0x70] sm:$0xff] %v538
    %571 = vst [vmem:[#allocation2 + $0x78] sm:$0xff] %v539
    %572 = vst [vmem:[#allocation2 + $0x80] sm:$0xff] %v540
    %573 = vst [vmem:[#allocation2 + $0x88] sm:$0xff] %v541
    %574 = vst [vmem:[#allocation2 + $0x90] sm:$0xff] %v542
    %575 = vst [vmem:[#allocation2 + $0x98] sm:$0xff] %v543
    %576 = vst [vmem:[#allocation2 + $0xa0] sm:$0xff] %v544
    %577 = vst [vmem:[#allocation2 + $0xa8] sm:$0xff] %v545
    %578 = vst [vmem:[#allocation2 + $0xb0] sm:$0xff] %v546
    %579 = vst [vmem:[#allocation2 + $0xb8] sm:$0xff] %v547
    %580 = vst [vmem:[#allocation2 + $0xc0] sm:$0xff] %v548
    %581 = vst [vmem:[#allocation2 + $0xc8] sm:$0xff] %v549
    %582 = vst [vmem:[#allocation2 + $0xd0] sm:$0xff] %v550
    %583 = vst [vmem:[#allocation2 + $0xd8] sm:$0xff] %v551
    %584 = vst [vmem:[#allocation2 + $0xe0] sm:$0xff] %v552
    %585 = vst [vmem:[#allocation2 + $0xe8] sm:$0xff] %v553
    %586 = vst [vmem:[#allocation2 + $0xf0] sm:$0xff] %v554
    %587 = vst [vmem:[#allocation2 + $0xf8] sm:$0xff] %v555
    %v588 = vld [vmem:[#allocation3] sm:$0xff]
    %v589 = vld [vmem:[#allocation3 + $0x8] sm:$0xff]
    %v590 = vld [vmem:[#allocation3 + $0x10] sm:$0xff]
    %v591 = vld [vmem:[#allocation3 + $0x18] sm:$0xff]
    %v592 = vld [vmem:[#allocation3 + $0x20] sm:$0xff]
    %v593 = vld [vmem:[#allocation3 + $0x28] sm:$0xff]
    %v594 = vld [vmem:[#allocation3 + $0x30] sm:$0xff]
    %v595 = vld [vmem:[#allocation3 + $0x38] sm:$0xff]
    %v596 = vld [vmem:[#allocation3 + $0x40] sm:$0xff]
    %v597 = vld [vmem:[#allocation3 + $0x48] sm:$0xff]
    %v598 = vld [vmem:[#allocation3 + $0x50] sm:$0xff]
    %v599 = vld [vmem:[#allocation3 + $0x58] sm:$0xff]
    %v600 = vld [vmem:[#allocation3 + $0x60] sm:$0xff]
    %v601 = vld [vmem:[#allocation3 + $0x68] sm:$0xff]
    %v602 = vld [vmem:[#allocation3 + $0x70] sm:$0xff]
    %v603 = vld [vmem:[#allocation3 + $0x78] sm:$0xff]
    %v604 = vld [vmem:[#allocation3 + $0x80] sm:$0xff]
    %v605 = vld [vmem:[#allocation3 + $0x88] sm:$0xff]
    %v606 = vld [vmem:[#allocation3 + $0x90] sm:$0xff]
    %v607 = vld [vmem:[#allocation3 + $0x98] sm:$0xff]
    %v608 = vld [vmem:[#allocation3 + $0xa0] sm:$0xff]
    %v609 = vld [vmem:[#allocation3 + $0xa8] sm:$0xff]
    %v610 = vld [vmem:[#allocation3 + $0xb0] sm:$0xff]
    %v611 = vld [vmem:[#allocation3 + $0xb8] sm:$0xff]
    %v612 = vld [vmem:[#allocation3 + $0xc0] sm:$0xff]
    %v613 = vld [vmem:[#allocation3 + $0xc8] sm:$0xff]
    %v614 = vld [vmem:[#allocation3 + $0xd0] sm:$0xff]
    %v615 = vld [vmem:[#allocation3 + $0xd8] sm:$0xff]
    %v616 = vld [vmem:[#allocation3 + $0xe0] sm:$0xff]
    %v617 = vld [vmem:[#allocation3 + $0xe8] sm:$0xff]
    %v618 = vld [vmem:[#allocation3 + $0xf0] sm:$0xff]
    %v619 = vld [vmem:[#allocation3 + $0xf8] sm:$0xff]
    %v620 = vld [vmem:[#allocation5] sm:$0xf]
    %v621 = vld [vmem:[#allocation5 + $0x4] sm:$0xf]
    %v622 = vld [vmem:[#allocation5 + $0x8] sm:$0xf]
    %v623 = vld [vmem:[#allocation5 + $0xc] sm:$0xf]
    %v628 = vunpack.c.l.b16 %v620
    %v629 = vunpack.c.l.b16 %v621
    %v630 = vunpack.c.l.b16 %v622
    %v631 = vunpack.c.l.b16 %v623
    %v632 = vpack.c.b16 %v629, %v628
    %v633 = vpack.c.b16 %v631, %v630
    %636 = vmatpush.bf16.msra.mxu0 0
    %637 = vmatpush.bf16.msra.mxu0 0
    %638 = vmatpush.bf16.msra.mxu0 0
    %639 = vmatpush.bf16.msra.mxu0 0
    %640 = vmatpush.bf16.msra.mxu0 0
    %641 = vmatpush.bf16.msra.mxu0 0
    %642 = vmatpush.bf16.msra.mxu0 %v633
    %643 = vmatpush.bf16.msra.mxu0 %v632
    %644 = vmatmul.bf16.gmra.mxu0 %v388
    %v645 = vpop.f32.mrf.mxu0
    %v646 = vadd.f32 0.0, %v645
    %v647 = vpop.f32.mrf.mxu0
    %v648 = vadd.f32 0.0, %v647
    %649 = vmatmul.bf16.gmra.mxu0 %v391
    %v650 = vpop.f32.mrf.mxu0
    %v651 = vadd.f32 0.0, %v650
    %v652 = vpop.f32.mrf.mxu0
    %v653 = vadd.f32 0.0, %v652
    %654 = vmatmul.bf16.gmra.mxu0 %v394
    %v655 = vpop.f32.mrf.mxu0
    %v656 = vadd.f32 0.0, %v655
    %v657 = vpop.f32.mrf.mxu0
    %v658 = vadd.f32 0.0, %v657
    %659 = vmatmul.bf16.gmra.mxu0 %v397
    %v660 = vpop.f32.mrf.mxu0
    %v661 = vadd.f32 0.0, %v660
    %v662 = vpop.f32.mrf.mxu0
    %v663 = vadd.f32 0.0, %v662
    %664 = vmatmul.bf16.gmra.mxu0 %v400
    %v665 = vpop.f32.mrf.mxu0
    %v666 = vadd.f32 0.0, %v665
    %v667 = vpop.f32.mrf.mxu0
    %v668 = vadd.f32 0.0, %v667
    %669 = vmatmul.bf16.gmra.mxu0 %v403
    %v670 = vpop.f32.mrf.mxu0
    %v671 = vadd.f32 0.0, %v670
    %v672 = vpop.f32.mrf.mxu0
    %v673 = vadd.f32 0.0, %v672
    %674 = vmatmul.bf16.gmra.mxu0 %v406
    %v675 = vpop.f32.mrf.mxu0
    %v676 = vadd.f32 0.0, %v675
    %v677 = vpop.f32.mrf.mxu0
    %v678 = vadd.f32 0.0, %v677
    %679 = vmatmul.bf16.gmra.mxu0 %v409
    %v680 = vpop.f32.mrf.mxu0
    %v681 = vadd.f32 0.0, %v680
    %v682 = vpop.f32.mrf.mxu0
    %v683 = vadd.f32 0.0, %v682
    %684 = vmatmul.bf16.gmra.mxu0 %v412
    %v685 = vpop.f32.mrf.mxu0
    %v686 = vadd.f32 0.0, %v685
    %v687 = vpop.f32.mrf.mxu0
    %v688 = vadd.f32 0.0, %v687
    %689 = vmatmul.bf16.gmra.mxu0 %v415
    %v690 = vpop.f32.mrf.mxu0
    %v691 = vadd.f32 0.0, %v690
    %v692 = vpop.f32.mrf.mxu0
    %v693 = vadd.f32 0.0, %v692
    %694 = vmatmul.bf16.gmra.mxu0 %v418
    %v695 = vpop.f32.mrf.mxu0
    %v696 = vadd.f32 0.0, %v695
    %v697 = vpop.f32.mrf.mxu0
    %v698 = vadd.f32 0.0, %v697
    %699 = vmatmul.bf16.gmra.mxu0 %v421
    %v700 = vpop.f32.mrf.mxu0
    %v701 = vadd.f32 0.0, %v700
    %v702 = vpop.f32.mrf.mxu0
    %v703 = vadd.f32 0.0, %v702
    %704 = vmatmul.bf16.gmra.mxu0 %v424
    %v705 = vpop.f32.mrf.mxu0
    %v706 = vadd.f32 0.0, %v705
    %v707 = vpop.f32.mrf.mxu0
    %v708 = vadd.f32 0.0, %v707
    %709 = vmatmul.bf16.gmra.mxu0 %v427
    %v710 = vpop.f32.mrf.mxu0
    %v711 = vadd.f32 0.0, %v710
    %v712 = vpop.f32.mrf.mxu0
    %v713 = vadd.f32 0.0, %v712
    %714 = vmatmul.bf16.gmra.mxu0 %v430
    %v715 = vpop.f32.mrf.mxu0
    %v716 = vadd.f32 0.0, %v715
    %v717 = vpop.f32.mrf.mxu0
    %v718 = vadd.f32 0.0, %v717
    %719 = vmatmul.bf16.gmra.mxu0 %v433
    %v720 = vpop.f32.mrf.mxu0
    %v721 = vadd.f32 0.0, %v720
    %v722 = vpop.f32.mrf.mxu0
    %v723 = vadd.f32 0.0, %v722
    %724 = vdwg.mxu0
    %v725 = vadd.f32 %v588, %v646
    %v726 = vadd.f32 %v589, %v648
    %v727 = vadd.f32 %v590, %v651
    %v728 = vadd.f32 %v591, %v653
    %v729 = vadd.f32 %v592, %v656
    %v730 = vadd.f32 %v593, %v658
    %v731 = vadd.f32 %v594, %v661
    %v732 = vadd.f32 %v595, %v663
    %v733 = vadd.f32 %v596, %v666
    %v734 = vadd.f32 %v597, %v668
    %v735 = vadd.f32 %v598, %v671
    %v736 = vadd.f32 %v599, %v673
    %v737 = vadd.f32 %v600, %v676
    %v738 = vadd.f32 %v601, %v678
    %v739 = vadd.f32 %v602, %v681
    %v740 = vadd.f32 %v603, %v683
    %v741 = vadd.f32 %v604, %v686
    %v742 = vadd.f32 %v605, %v688
    %v743 = vadd.f32 %v606, %v691
    %v744 = vadd.f32 %v607, %v693
    %v745 = vadd.f32 %v608, %v696
    %v746 = vadd.f32 %v609, %v698
    %v747 = vadd.f32 %v610, %v701
    %v748 = vadd.f32 %v611, %v703
    %v749 = vadd.f32 %v612, %v706
    %v750 = vadd.f32 %v613, %v708
    %v751 = vadd.f32 %v614, %v711
    %v752 = vadd.f32 %v615, %v713
    %v753 = vadd.f32 %v616, %v716
    %v754 = vadd.f32 %v617, %v718
    %v755 = vadd.f32 %v618, %v721
    %v756 = vadd.f32 %v619, %v723
    %757 = vst [vmem:[#allocation3] sm:$0xff] %v725
    %758 = vst [vmem:[#allocation3 + $0x8] sm:$0xff] %v726
    %759 = vst [vmem:[#allocation3 + $0x10] sm:$0xff] %v727
    %760 = vst [vmem:[#allocation3 + $0x18] sm:$0xff] %v728
    %761 = vst [vmem:[#allocation3 + $0x20] sm:$0xff] %v729
    %762 = vst [vmem:[#allocation3 + $0x28] sm:$0xff] %v730
    %763 = vst [vmem:[#allocation3 + $0x30] sm:$0xff] %v731
    %764 = vst [vmem:[#allocation3 + $0x38] sm:$0xff] %v732
    %765 = vst [vmem:[#allocation3 + $0x40] sm:$0xff] %v733
    %766 = vst [vmem:[#allocation3 + $0x48] sm:$0xff] %v734
    %767 = vst [vmem:[#allocation3 + $0x50] sm:$0xff] %v735
    %768 = vst [vmem:[#allocation3 + $0x58] sm:$0xff] %v736
    %769 = vst [vmem:[#allocation3 + $0x60] sm:$0xff] %v737
    %770 = vst [vmem:[#allocation3 + $0x68] sm:$0xff] %v738
    %771 = vst [vmem:[#allocation3 + $0x70] sm:$0xff] %v739
    %772 = vst [vmem:[#allocation3 + $0x78] sm:$0xff] %v740
    %773 = vst [vmem:[#allocation3 + $0x80] sm:$0xff] %v741
    %774 = vst [vmem:[#allocation3 + $0x88] sm:$0xff] %v742
    %775 = vst [vmem:[#allocation3 + $0x90] sm:$0xff] %v743
    %776 = vst [vmem:[#allocation3 + $0x98] sm:$0xff] %v744
    %777 = vst [vmem:[#allocation3 + $0xa0] sm:$0xff] %v745
    %778 = vst [vmem:[#allocation3 + $0xa8] sm:$0xff] %v746
    %779 = vst [vmem:[#allocation3 + $0xb0] sm:$0xff] %v747
    %780 = vst [vmem:[#allocation3 + $0xb8] sm:$0xff] %v748
    %781 = vst [vmem:[#allocation3 + $0xc0] sm:$0xff] %v749
    %782 = vst [vmem:[#allocation3 + $0xc8] sm:$0xff] %v750
    %783 = vst [vmem:[#allocation3 + $0xd0] sm:$0xff] %v751
    %784 = vst [vmem:[#allocation3 + $0xd8] sm:$0xff] %v752
    %785 = vst [vmem:[#allocation3 + $0xe0] sm:$0xff] %v753
    %786 = vst [vmem:[#allocation3 + $0xe8] sm:$0xff] %v754
    %787 = vst [vmem:[#allocation3 + $0xf0] sm:$0xff] %v755
    %788 = vst [vmem:[#allocation3 + $0xf8] sm:$0xff] %v756
    // Predicated region
    $region108: #{tpu_custom_call.1} parent=1 // pred_check
      %p789 = pneg %p150
    $region109: #{tpu_custom_call.1} parent=1 // pred_check_branch
      %791 = sbr.rel (%p789) target = $region111
    $region110: #{tpu_custom_call.1} parent=1 // pred_region
      %v792 = vld [vmem:[#allocation2] sm:$0xff]
      %v793 = vld [vmem:[#allocation2 + $0x8] sm:$0xff]
      %v794 = vld [vmem:[#allocation2 + $0x10] sm:$0xff]
      %v795 = vld [vmem:[#allocation2 + $0x18] sm:$0xff]
      %v796 = vld [vmem:[#allocation2 + $0x20] sm:$0xff]
      %v797 = vld [vmem:[#allocation2 + $0x28] sm:$0xff]
      %v798 = vld [vmem:[#allocation2 + $0x30] sm:$0xff]
      %v799 = vld [vmem:[#allocation2 + $0x38] sm:$0xff]
      %v800 = vld [vmem:[#allocation2 + $0x40] sm:$0xff]
      %v801 = vld [vmem:[#allocation2 + $0x48] sm:$0xff]
      %v802 = vld [vmem:[#allocation2 + $0x50] sm:$0xff]
      %v803 = vld [vmem:[#allocation2 + $0x58] sm:$0xff]
      %v804 = vld [vmem:[#allocation2 + $0x60] sm:$0xff]
      %v805 = vld [vmem:[#allocation2 + $0x68] sm:$0xff]
      %v806 = vld [vmem:[#allocation2 + $0x70] sm:$0xff]
      %v807 = vld [vmem:[#allocation2 + $0x78] sm:$0xff]
      %v808 = vld [vmem:[#allocation2 + $0x80] sm:$0xff]
      %v809 = vld [vmem:[#allocation2 + $0x88] sm:$0xff]
      %v810 = vld [vmem:[#allocation2 + $0x90] sm:$0xff]
      %v811 = vld [vmem:[#allocation2 + $0x98] sm:$0xff]
      %v812 = vld [vmem:[#allocation2 + $0xa0] sm:$0xff]
      %v813 = vld [vmem:[#allocation2 + $0xa8] sm:$0xff]
      %v814 = vld [vmem:[#allocation2 + $0xb0] sm:$0xff]
      %v815 = vld [vmem:[#allocation2 + $0xb8] sm:$0xff]
      %v816 = vld [vmem:[#allocation2 + $0xc0] sm:$0xff]
      %v817 = vld [vmem:[#allocation2 + $0xc8] sm:$0xff]
      %v818 = vld [vmem:[#allocation2 + $0xd0] sm:$0xff]
      %v819 = vld [vmem:[#allocation2 + $0xd8] sm:$0xff]
      %v820 = vld [vmem:[#allocation2 + $0xe0] sm:$0xff]
      %v821 = vld [vmem:[#allocation2 + $0xe8] sm:$0xff]
      %v822 = vld [vmem:[#allocation2 + $0xf0] sm:$0xff]
      %v823 = vld [vmem:[#allocation2 + $0xf8] sm:$0xff]
      %v824 = vld [vmem:[#allocation3] sm:$0xff]
      %v825 = vld [vmem:[#allocation3 + $0x8] sm:$0xff]
      %v826 = vld [vmem:[#allocation3 + $0x10] sm:$0xff]
      %v827 = vld [vmem:[#allocation3 + $0x18] sm:$0xff]
      %v828 = vld [vmem:[#allocation3 + $0x20] sm:$0xff]
      %v829 = vld [vmem:[#allocation3 + $0x28] sm:$0xff]
      %v830 = vld [vmem:[#allocation3 + $0x30] sm:$0xff]
      %v831 = vld [vmem:[#allocation3 + $0x38] sm:$0xff]
      %v832 = vld [vmem:[#allocation3 + $0x40] sm:$0xff]
      %v833 = vld [vmem:[#allocation3 + $0x48] sm:$0xff]
      %v834 = vld [vmem:[#allocation3 + $0x50] sm:$0xff]
      %v835 = vld [vmem:[#allocation3 + $0x58] sm:$0xff]
      %v836 = vld [vmem:[#allocation3 + $0x60] sm:$0xff]
      %v837 = vld [vmem:[#allocation3 + $0x68] sm:$0xff]
      %v838 = vld [vmem:[#allocation3 + $0x70] sm:$0xff]
      %v839 = vld [vmem:[#allocation3 + $0x78] sm:$0xff]
      %v840 = vld [vmem:[#allocation3 + $0x80] sm:$0xff]
      %v841 = vld [vmem:[#allocation3 + $0x88] sm:$0xff]
      %v842 = vld [vmem:[#allocation3 + $0x90] sm:$0xff]
      %v843 = vld [vmem:[#allocation3 + $0x98] sm:$0xff]
      %v844 = vld [vmem:[#allocation3 + $0xa0] sm:$0xff]
      %v845 = vld [vmem:[#allocation3 + $0xa8] sm:$0xff]
      %v846 = vld [vmem:[#allocation3 + $0xb0] sm:$0xff]
      %v847 = vld [vmem:[#allocation3 + $0xb8] sm:$0xff]
      %v848 = vld [vmem:[#allocation3 + $0xc0] sm:$0xff]
      %v849 = vld [vmem:[#allocation3 + $0xc8] sm:$0xff]
      %v850 = vld [vmem:[#allocation3 + $0xd0] sm:$0xff]
      %v851 = vld [vmem:[#allocation3 + $0xd8] sm:$0xff]
      %v852 = vld [vmem:[#allocation3 + $0xe0] sm:$0xff]
      %v853 = vld [vmem:[#allocation3 + $0xe8] sm:$0xff]
      %v854 = vld [vmem:[#allocation3 + $0xf0] sm:$0xff]
      %v855 = vld [vmem:[#allocation3 + $0xf8] sm:$0xff]
      %v856 = vmul.f32 %v824, 0.5
      %v857 = vmul.f32 %v825, 0.5
      %v858 = vmul.f32 %v826, 0.5
      %v859 = vmul.f32 %v827, 0.5
      %v860 = vmul.f32 %v828, 0.5
      %v861 = vmul.f32 %v829, 0.5
      %v862 = vmul.f32 %v830, 0.5
      %v863 = vmul.f32 %v831, 0.5
      %v864 = vmul.f32 %v832, 0.5
      %v865 = vmul.f32 %v833, 0.5
      %v866 = vmul.f32 %v834, 0.5
      %v867 = vmul.f32 %v835, 0.5
      %v868 = vmul.f32 %v836, 0.5
      %v869 = vmul.f32 %v837, 0.5
      %v870 = vmul.f32 %v838, 0.5
      %v871 = vmul.f32 %v839, 0.5
      %v872 = vmul.f32 %v840, 0.5
      %v873 = vmul.f32 %v841, 0.5
      %v874 = vmul.f32 %v842, 0.5
      %v875 = vmul.f32 %v843, 0.5
      %v876 = vmul.f32 %v844, 0.5
      %v877 = vmul.f32 %v845, 0.5
      %v878 = vmul.f32 %v846, 0.5
      %v879 = vmul.f32 %v847, 0.5
      %v880 = vmul.f32 %v848, 0.5
      %v881 = vmul.f32 %v849, 0.5
      %v882 = vmul.f32 %v850, 0.5
      %v883 = vmul.f32 %v851, 0.5
      %v884 = vmul.f32 %v852, 0.5
      %v885 = vmul.f32 %v853, 0.5
      %v886 = vmul.f32 %v854, 0.5
      %v887 = vmul.f32 %v855, 0.5
      %v888 = vmul.f32 %v824, 0.70710677
      %v889 = vmul.f32 %v825, 0.70710677
      %v890 = vmul.f32 %v826, 0.70710677
      %v891 = vmul.f32 %v827, 0.70710677
      %v892 = vmul.f32 %v828, 0.70710677
      %v893 = vmul.f32 %v829, 0.70710677
      %v894 = vmul.f32 %v830, 0.70710677
      %v895 = vmul.f32 %v831, 0.70710677
      %v896 = vmul.f32 %v832, 0.70710677
      %v897 = vmul.f32 %v833, 0.70710677
      %v898 = vmul.f32 %v834, 0.70710677
      %v899 = vmul.f32 %v835, 0.70710677
      %v900 = vmul.f32 %v836, 0.70710677
      %v901 = vmul.f32 %v837, 0.70710677
      %v902 = vmul.f32 %v838, 0.70710677
      %v903 = vmul.f32 %v839, 0.70710677
      %v904 = vmul.f32 %v840, 0.70710677
      %v905 = vmul.f32 %v841, 0.70710677
      %v906 = vmul.f32 %v842, 0.70710677
      %v907 = vmul.f32 %v843, 0.70710677
      %v908 = vmul.f32 %v844, 0.70710677
      %v909 = vmul.f32 %v845, 0.70710677
      %v910 = vmul.f32 %v846, 0.70710677
      %v911 = vmul.f32 %v847, 0.70710677
      %v912 = vmul.f32 %v848, 0.70710677
      %v913 = vmul.f32 %v849, 0.70710677
      %v914 = vmul.f32 %v850, 0.70710677
      %v915 = vmul.f32 %v851, 0.70710677
      %v916 = vmul.f32 %v852, 0.70710677
      %v917 = vmul.f32 %v853, 0.70710677
      %v918 = vmul.f32 %v854, 0.70710677
      %v919 = vmul.f32 %v855, 0.70710677
      %v920 = vmul.f32 %v888, %v888
      %v921 = vmin.f32 16.0, %v920
      %v922 = vmul.f32 %v921, 2.1237322e-06
      %v923 = vadd.f32 %v922, 0.00028619796
      %v924 = vmul.f32 %v921, %v923
      %v925 = vadd.f32 %v924, 0.0036580483
      %v926 = vmul.f32 %v921, %v925
      %v927 = vadd.f32 %v926, 0.05243302
      %v928 = vmul.f32 %v921, %v927
      %v929 = vadd.f32 %v928, 0.18741608
      %v930 = vmul.f32 %v921, %v929
      %v931 = vadd.f32 %v930, 1.1283791
      %v932 = vmul.f32 %v888, %v931
      %v933 = vmul.f32 %v921, 3.8918573e-05
      %v934 = vadd.f32 %v933, 0.001143296
      %v935 = vmul.f32 %v921, %v934
      %v936 = vadd.f32 %v935, 0.014752088
      %v937 = vmul.f32 %v921, %v936
      %v938 = vadd.f32 %v937, 0.112945676
      %v939 = vmul.f32 %v921, %v938
      %v940 = vadd.f32 %v939, 0.4994258
      %v941 = vmul.f32 %v921, %v940
      %v942 = vadd.f32 %v941, 1.0
      %v943 = vrcp.pop %v942
      %v944 = vmul.f32 %v942, %v943
      %v945 = vsub.f32 1.0, %v944
      %v946 = vmul.f32 %v943, %v945
      %v947 = vadd.f32 %v943, %v946
      %vm948 = vweird.f32 %v942
      %vm949 = vweird.f32 %v943
      %vm950 = vmor %vm948, %vm949
      %v951 = vsel %vm950, %v943, %v947
      %v952 = vand.u32 2147483647, %v942
      %vm953 = vcmp.eq.f32.partialorder %v952, 8.507059e+37
      %v954 = vand.u32 %v942, 2147483648
      %v955 = vor.u32 1.1754944e-38, %v954
      %v956 = vsel %vm953, %v955, %v951
      %v957 = vmul.f32 %v932, %v956
      %v958 = vmin.f32 %v957, 1.0
      %v959 = vmax.f32 %v958, -1.0
      %v960 = vmul.f32 %v889, %v889
      %v961 = vmin.f32 16.0, %v960
      %v962 = vmul.f32 %v961, 2.1237322e-06
      %v963 = vadd.f32 %v962, 0.00028619796
      %v964 = vmul.f32 %v961, %v963
      %v965 = vadd.f32 %v964, 0.0036580483
      %v966 = vmul.f32 %v961, %v965
      %v967 = vadd.f32 %v966, 0.05243302
      %v968 = vmul.f32 %v961, %v967
      %v969 = vadd.f32 %v968, 0.18741608
      %v970 = vmul.f32 %v961, %v969
      %v971 = vadd.f32 %v970, 1.1283791
      %v972 = vmul.f32 %v889, %v971
      %v973 = vmul.f32 %v961, 3.8918573e-05
      %v974 = vadd.f32 %v973, 0.001143296
      %v975 = vmul.f32 %v961, %v974
      %v976 = vadd.f32 %v975, 0.014752088
      %v977 = vmul.f32 %v961, %v976
      %v978 = vadd.f32 %v977, 0.112945676
      %v979 = vmul.f32 %v961, %v978
      %v980 = vadd.f32 %v979, 0.4994258
      %v981 = vmul.f32 %v961, %v980
      %v982 = vadd.f32 %v981, 1.0
      %v983 = vrcp.pop %v982
      %v984 = vmul.f32 %v982, %v983
      %v985 = vsub.f32 1.0, %v984
      %v986 = vmul.f32 %v983, %v985
      %v987 = vadd.f32 %v983, %v986
      %vm988 = vweird.f32 %v982
      %vm989 = vweird.f32 %v983
      %vm990 = vmor %vm988, %vm989
      %v991 = vsel %vm990, %v983, %v987
      %v992 = vand.u32 2147483647, %v982
      %vm993 = vcmp.eq.f32.partialorder %v992, 8.507059e+37
      %v994 = vand.u32 %v982, 2147483648
      %v995 = vor.u32 1.1754944e-38, %v994
      %v996 = vsel %vm993, %v995, %v991
      %v997 = vmul.f32 %v972, %v996
      %v998 = vmin.f32 %v997, 1.0
      %v999 = vmax.f32 %v998, -1.0
      %v1000 = vmul.f32 %v890, %v890
      %v1001 = vmin.f32 16.0, %v1000
      %v1002 = vmul.f32 %v1001, 2.1237322e-06
      %v1003 = vadd.f32 %v1002, 0.00028619796
      %v1004 = vmul.f32 %v1001, %v1003
      %v1005 = vadd.f32 %v1004, 0.0036580483
      %v1006 = vmul.f32 %v1001, %v1005
      %v1007 = vadd.f32 %v1006, 0.05243302
      %v1008 = vmul.f32 %v1001, %v1007
      %v1009 = vadd.f32 %v1008, 0.18741608
      %v1010 = vmul.f32 %v1001, %v1009
      %v1011 = vadd.f32 %v1010, 1.1283791
      %v1012 = vmul.f32 %v890, %v1011
      %v1013 = vmul.f32 %v1001, 3.8918573e-05
      %v1014 = vadd.f32 %v1013, 0.001143296
      %v1015 = vmul.f32 %v1001, %v1014
      %v1016 = vadd.f32 %v1015, 0.014752088
      %v1017 = vmul.f32 %v1001, %v1016
      %v1018 = vadd.f32 %v1017, 0.112945676
      %v1019 = vmul.f32 %v1001, %v1018
      %v1020 = vadd.f32 %v1019, 0.4994258
      %v1021 = vmul.f32 %v1001, %v1020
      %v1022 = vadd.f32 %v1021, 1.0
      %v1023 = vrcp.pop %v1022
      %v1024 = vmul.f32 %v1022, %v1023
      %v1025 = vsub.f32 1.0, %v1024
      %v1026 = vmul.f32 %v1023, %v1025
      %v1027 = vadd.f32 %v1023, %v1026
      %vm1028 = vweird.f32 %v1022
      %vm1029 = vweird.f32 %v1023
      %vm1030 = vmor %vm1028, %vm1029
      %v1031 = vsel %vm1030, %v1023, %v1027
      %v1032 = vand.u32 2147483647, %v1022
      %vm1033 = vcmp.eq.f32.partialorder %v1032, 8.507059e+37
      %v1034 = vand.u32 %v1022, 2147483648
      %v1035 = vor.u32 1.1754944e-38, %v1034
      %v1036 = vsel %vm1033, %v1035, %v1031
      %v1037 = vmul.f32 %v1012, %v1036
      %v1038 = vmin.f32 %v1037, 1.0
      %v1039 = vmax.f32 %v1038, -1.0
      %v1040 = vmul.f32 %v891, %v891
      %v1041 = vmin.f32 16.0, %v1040
      %v1042 = vmul.f32 %v1041, 2.1237322e-06
      %v1043 = vadd.f32 %v1042, 0.00028619796
      %v1044 = vmul.f32 %v1041, %v1043
      %v1045 = vadd.f32 %v1044, 0.0036580483
      %v1046 = vmul.f32 %v1041, %v1045
      %v1047 = vadd.f32 %v1046, 0.05243302
      %v1048 = vmul.f32 %v1041, %v1047
      %v1049 = vadd.f32 %v1048, 0.18741608
      %v1050 = vmul.f32 %v1041, %v1049
      %v1051 = vadd.f32 %v1050, 1.1283791
      %v1052 = vmul.f32 %v891, %v1051
      %v1053 = vmul.f32 %v1041, 3.8918573e-05
      %v1054 = vadd.f32 %v1053, 0.001143296
      %v1055 = vmul.f32 %v1041, %v1054
      %v1056 = vadd.f32 %v1055, 0.014752088
      %v1057 = vmul.f32 %v1041, %v1056
      %v1058 = vadd.f32 %v1057, 0.112945676
      %v1059 = vmul.f32 %v1041, %v1058
      %v1060 = vadd.f32 %v1059, 0.4994258
      %v1061 = vmul.f32 %v1041, %v1060
      %v1062 = vadd.f32 %v1061, 1.0
      %v1063 = vrcp.pop %v1062
      %v1064 = vmul.f32 %v1062, %v1063
      %v1065 = vsub.f32 1.0, %v1064
      %v1066 = vmul.f32 %v1063, %v1065
      %v1067 = vadd.f32 %v1063, %v1066
      %vm1068 = vweird.f32 %v1062
      %vm1069 = vweird.f32 %v1063
      %vm1070 = vmor %vm1068, %vm1069
      %v1071 = vsel %vm1070, %v1063, %v1067
      %v1072 = vand.u32 2147483647, %v1062
      %vm1073 = vcmp.eq.f32.partialorder %v1072, 8.507059e+37
      %v1074 = vand.u32 %v1062, 2147483648
      %v1075 = vor.u32 1.1754944e-38, %v1074
      %v1076 = vsel %vm1073, %v1075, %v1071
      %v1077 = vmul.f32 %v1052, %v1076
      %v1078 = vmin.f32 %v1077, 1.0
      %v1079 = vmax.f32 %v1078, -1.0
      %v1080 = vmul.f32 %v892, %v892
      %v1081 = vmin.f32 16.0, %v1080
      %v1082 = vmul.f32 %v1081, 2.1237322e-06
      %v1083 = vadd.f32 %v1082, 0.00028619796
      %v1084 = vmul.f32 %v1081, %v1083
      %v1085 = vadd.f32 %v1084, 0.0036580483
      %v1086 = vmul.f32 %v1081, %v1085
      %v1087 = vadd.f32 %v1086, 0.05243302
      %v1088 = vmul.f32 %v1081, %v1087
      %v1089 = vadd.f32 %v1088, 0.18741608
      %v1090 = vmul.f32 %v1081, %v1089
      %v1091 = vadd.f32 %v1090, 1.1283791
      %v1092 = vmul.f32 %v892, %v1091
      %v1093 = vmul.f32 %v1081, 3.8918573e-05
      %v1094 = vadd.f32 %v1093, 0.001143296
      %v1095 = vmul.f32 %v1081, %v1094
      %v1096 = vadd.f32 %v1095, 0.014752088
      %v1097 = vmul.f32 %v1081, %v1096
      %v1098 = vadd.f32 %v1097, 0.112945676
      %v1099 = vmul.f32 %v1081, %v1098
      %v1100 = vadd.f32 %v1099, 0.4994258
      %v1101 = vmul.f32 %v1081, %v1100
      %v1102 = vadd.f32 %v1101, 1.0
      %v1103 = vrcp.pop %v1102
      %v1104 = vmul.f32 %v1102, %v1103
      %v1105 = vsub.f32 1.0, %v1104
      %v1106 = vmul.f32 %v1103, %v1105
      %v1107 = vadd.f32 %v1103, %v1106
      %vm1108 = vweird.f32 %v1102
      %vm1109 = vweird.f32 %v1103
      %vm1110 = vmor %vm1108, %vm1109
      %v1111 = vsel %vm1110, %v1103, %v1107
      %v1112 = vand.u32 2147483647, %v1102
      %vm1113 = vcmp.eq.f32.partialorder %v1112, 8.507059e+37
      %v1114 = vand.u32 %v1102, 2147483648
      %v1115 = vor.u32 1.1754944e-38, %v1114
      %v1116 = vsel %vm1113, %v1115, %v1111
      %v1117 = vmul.f32 %v1092, %v1116
      %v1118 = vmin.f32 %v1117, 1.0
      %v1119 = vmax.f32 %v1118, -1.0
      %v1120 = vmul.f32 %v893, %v893
      %v1121 = vmin.f32 16.0, %v1120
      %v1122 = vmul.f32 %v1121, 2.1237322e-06
      %v1123 = vadd.f32 %v1122, 0.00028619796
      %v1124 = vmul.f32 %v1121, %v1123
      %v1125 = vadd.f32 %v1124, 0.0036580483
      %v1126 = vmul.f32 %v1121, %v1125
      %v1127 = vadd.f32 %v1126, 0.05243302
      %v1128 = vmul.f32 %v1121, %v1127
      %v1129 = vadd.f32 %v1128, 0.18741608
      %v1130 = vmul.f32 %v1121, %v1129
      %v1131 = vadd.f32 %v1130, 1.1283791
      %v1132 = vmul.f32 %v893, %v1131
      %v1133 = vmul.f32 %v1121, 3.8918573e-05
      %v1134 = vadd.f32 %v1133, 0.001143296
      %v1135 = vmul.f32 %v1121, %v1134
      %v1136 = vadd.f32 %v1135, 0.014752088
      %v1137 = vmul.f32 %v1121, %v1136
      %v1138 = vadd.f32 %v1137, 0.112945676
      %v1139 = vmul.f32 %v1121, %v1138
      %v1140 = vadd.f32 %v1139, 0.4994258
      %v1141 = vmul.f32 %v1121, %v1140
      %v1142 = vadd.f32 %v1141, 1.0
      %v1143 = vrcp.pop %v1142
      %v1144 = vmul.f32 %v1142, %v1143
      %v1145 = vsub.f32 1.0, %v1144
      %v1146 = vmul.f32 %v1143, %v1145
      %v1147 = vadd.f32 %v1143, %v1146
      %vm1148 = vweird.f32 %v1142
      %vm1149 = vweird.f32 %v1143
      %vm1150 = vmor %vm1148, %vm1149
      %v1151 = vsel %vm1150, %v1143, %v1147
      %v1152 = vand.u32 2147483647, %v1142
      %vm1153 = vcmp.eq.f32.partialorder %v1152, 8.507059e+37
      %v1154 = vand.u32 %v1142, 2147483648
      %v1155 = vor.u32 1.1754944e-38, %v1154
      %v1156 = vsel %vm1153, %v1155, %v1151
      %v1157 = vmul.f32 %v1132, %v1156
      %v1158 = vmin.f32 %v1157, 1.0
      %v1159 = vmax.f32 %v1158, -1.0
      %v1160 = vmul.f32 %v894, %v894
      %v1161 = vmin.f32 16.0, %v1160
      %v1162 = vmul.f32 %v1161, 2.1237322e-06
      %v1163 = vadd.f32 %v1162, 0.00028619796
      %v1164 = vmul.f32 %v1161, %v1163
      %v1165 = vadd.f32 %v1164, 0.0036580483
      %v1166 = vmul.f32 %v1161, %v1165
      %v1167 = vadd.f32 %v1166, 0.05243302
      %v1168 = vmul.f32 %v1161, %v1167
      %v1169 = vadd.f32 %v1168, 0.18741608
      %v1170 = vmul.f32 %v1161, %v1169
      %v1171 = vadd.f32 %v1170, 1.1283791
      %v1172 = vmul.f32 %v894, %v1171
      %v1173 = vmul.f32 %v1161, 3.8918573e-05
      %v1174 = vadd.f32 %v1173, 0.001143296
      %v1175 = vmul.f32 %v1161, %v1174
      %v1176 = vadd.f32 %v1175, 0.014752088
      %v1177 = vmul.f32 %v1161, %v1176
      %v1178 = vadd.f32 %v1177, 0.112945676
      %v1179 = vmul.f32 %v1161, %v1178
      %v1180 = vadd.f32 %v1179, 0.4994258
      %v1181 = vmul.f32 %v1161, %v1180
      %v1182 = vadd.f32 %v1181, 1.0
      %v1183 = vrcp.pop %v1182
      %v1184 = vmul.f32 %v1182, %v1183
      %v1185 = vsub.f32 1.0, %v1184
      %v1186 = vmul.f32 %v1183, %v1185
      %v1187 = vadd.f32 %v1183, %v1186
      %vm1188 = vweird.f32 %v1182
      %vm1189 = vweird.f32 %v1183
      %vm1190 = vmor %vm1188, %vm1189
      %v1191 = vsel %vm1190, %v1183, %v1187
      %v1192 = vand.u32 2147483647, %v1182
      %vm1193 = vcmp.eq.f32.partialorder %v1192, 8.507059e+37
      %v1194 = vand.u32 %v1182, 2147483648
      %v1195 = vor.u32 1.1754944e-38, %v1194
      %v1196 = vsel %vm1193, %v1195, %v1191
      %v1197 = vmul.f32 %v1172, %v1196
      %v1198 = vmin.f32 %v1197, 1.0
      %v1199 = vmax.f32 %v1198, -1.0
      %v1200 = vmul.f32 %v895, %v895
      %v1201 = vmin.f32 16.0, %v1200
      %v1202 = vmul.f32 %v1201, 2.1237322e-06
      %v1203 = vadd.f32 %v1202, 0.00028619796
      %v1204 = vmul.f32 %v1201, %v1203
      %v1205 = vadd.f32 %v1204, 0.0036580483
      %v1206 = vmul.f32 %v1201, %v1205
      %v1207 = vadd.f32 %v1206, 0.05243302
      %v1208 = vmul.f32 %v1201, %v1207
      %v1209 = vadd.f32 %v1208, 0.18741608
      %v1210 = vmul.f32 %v1201, %v1209
      %v1211 = vadd.f32 %v1210, 1.1283791
      %v1212 = vmul.f32 %v895, %v1211
      %v1213 = vmul.f32 %v1201, 3.8918573e-05
      %v1214 = vadd.f32 %v1213, 0.001143296
      %v1215 = vmul.f32 %v1201, %v1214
      %v1216 = vadd.f32 %v1215, 0.014752088
      %v1217 = vmul.f32 %v1201, %v1216
      %v1218 = vadd.f32 %v1217, 0.112945676
      %v1219 = vmul.f32 %v1201, %v1218
      %v1220 = vadd.f32 %v1219, 0.4994258
      %v1221 = vmul.f32 %v1201, %v1220
      %v1222 = vadd.f32 %v1221, 1.0
      %v1223 = vrcp.pop %v1222
      %v1224 = vmul.f32 %v1222, %v1223
      %v1225 = vsub.f32 1.0, %v1224
      %v1226 = vmul.f32 %v1223, %v1225
      %v1227 = vadd.f32 %v1223, %v1226
      %vm1228 = vweird.f32 %v1222
      %vm1229 = vweird.f32 %v1223
      %vm1230 = vmor %vm1228, %vm1229
      %v1231 = vsel %vm1230, %v1223, %v1227
      %v1232 = vand.u32 2147483647, %v1222
      %vm1233 = vcmp.eq.f32.partialorder %v1232, 8.507059e+37
      %v1234 = vand.u32 %v1222, 2147483648
      %v1235 = vor.u32 1.1754944e-38, %v1234
      %v1236 = vsel %vm1233, %v1235, %v1231
      %v1237 = vmul.f32 %v1212, %v1236
      %v1238 = vmin.f32 %v1237, 1.0
      %v1239 = vmax.f32 %v1238, -1.0
      %v1240 = vmul.f32 %v896, %v896
      %v1241 = vmin.f32 16.0, %v1240
      %v1242 = vmul.f32 %v1241, 2.1237322e-06
      %v1243 = vadd.f32 %v1242, 0.00028619796
      %v1244 = vmul.f32 %v1241, %v1243
      %v1245 = vadd.f32 %v1244, 0.0036580483
      %v1246 = vmul.f32 %v1241, %v1245
      %v1247 = vadd.f32 %v1246, 0.05243302
      %v1248 = vmul.f32 %v1241, %v1247
      %v1249 = vadd.f32 %v1248, 0.18741608
      %v1250 = vmul.f32 %v1241, %v1249
      %v1251 = vadd.f32 %v1250, 1.1283791
      %v1252 = vmul.f32 %v896, %v1251
      %v1253 = vmul.f32 %v1241, 3.8918573e-05
      %v1254 = vadd.f32 %v1253, 0.001143296
      %v1255 = vmul.f32 %v1241, %v1254
      %v1256 = vadd.f32 %v1255, 0.014752088
      %v1257 = vmul.f32 %v1241, %v1256
      %v1258 = vadd.f32 %v1257, 0.112945676
      %v1259 = vmul.f32 %v1241, %v1258
      %v1260 = vadd.f32 %v1259, 0.4994258
      %v1261 = vmul.f32 %v1241, %v1260
      %v1262 = vadd.f32 %v1261, 1.0
      %v1263 = vrcp.pop %v1262
      %v1264 = vmul.f32 %v1262, %v1263
      %v1265 = vsub.f32 1.0, %v1264
      %v1266 = vmul.f32 %v1263, %v1265
      %v1267 = vadd.f32 %v1263, %v1266
      %vm1268 = vweird.f32 %v1262
      %vm1269 = vweird.f32 %v1263
      %vm1270 = vmor %vm1268, %vm1269
      %v1271 = vsel %vm1270, %v1263, %v1267
      %v1272 = vand.u32 2147483647, %v1262
      %vm1273 = vcmp.eq.f32.partialorder %v1272, 8.507059e+37
      %v1274 = vand.u32 %v1262, 2147483648
      %v1275 = vor.u32 1.1754944e-38, %v1274
      %v1276 = vsel %vm1273, %v1275, %v1271
      %v1277 = vmul.f32 %v1252, %v1276
      %v1278 = vmin.f32 %v1277, 1.0
      %v1279 = vmax.f32 %v1278, -1.0
      %v1280 = vmul.f32 %v897, %v897
      %v1281 = vmin.f32 16.0, %v1280
      %v1282 = vmul.f32 %v1281, 2.1237322e-06
      %v1283 = vadd.f32 %v1282, 0.00028619796
      %v1284 = vmul.f32 %v1281, %v1283
      %v1285 = vadd.f32 %v1284, 0.0036580483
      %v1286 = vmul.f32 %v1281, %v1285
      %v1287 = vadd.f32 %v1286, 0.05243302
      %v1288 = vmul.f32 %v1281, %v1287
      %v1289 = vadd.f32 %v1288, 0.18741608
      %v1290 = vmul.f32 %v1281, %v1289
      %v1291 = vadd.f32 %v1290, 1.1283791
      %v1292 = vmul.f32 %v897, %v1291
      %v1293 = vmul.f32 %v1281, 3.8918573e-05
      %v1294 = vadd.f32 %v1293, 0.001143296
      %v1295 = vmul.f32 %v1281, %v1294
      %v1296 = vadd.f32 %v1295, 0.014752088
      %v1297 = vmul.f32 %v1281, %v1296
      %v1298 = vadd.f32 %v1297, 0.112945676
      %v1299 = vmul.f32 %v1281, %v1298
      %v1300 = vadd.f32 %v1299, 0.4994258
      %v1301 = vmul.f32 %v1281, %v1300
      %v1302 = vadd.f32 %v1301, 1.0
      %v1303 = vrcp.pop %v1302
      %v1304 = vmul.f32 %v1302, %v1303
      %v1305 = vsub.f32 1.0, %v1304
      %v1306 = vmul.f32 %v1303, %v1305
      %v1307 = vadd.f32 %v1303, %v1306
      %vm1308 = vweird.f32 %v1302
      %vm1309 = vweird.f32 %v1303
      %vm1310 = vmor %vm1308, %vm1309
      %v1311 = vsel %vm1310, %v1303, %v1307
      %v1312 = vand.u32 2147483647, %v1302
      %vm1313 = vcmp.eq.f32.partialorder %v1312, 8.507059e+37
      %v1314 = vand.u32 %v1302, 2147483648
      %v1315 = vor.u32 1.1754944e-38, %v1314
      %v1316 = vsel %vm1313, %v1315, %v1311
      %v1317 = vmul.f32 %v1292, %v1316
      %v1318 = vmin.f32 %v1317, 1.0
      %v1319 = vmax.f32 %v1318, -1.0
      %v1320 = vmul.f32 %v898, %v898
      %v1321 = vmin.f32 16.0, %v1320
      %v1322 = vmul.f32 %v1321, 2.1237322e-06
      %v1323 = vadd.f32 %v1322, 0.00028619796
      %v1324 = vmul.f32 %v1321, %v1323
      %v1325 = vadd.f32 %v1324, 0.0036580483
      %v1326 = vmul.f32 %v1321, %v1325
      %v1327 = vadd.f32 %v1326, 0.05243302
      %v1328 = vmul.f32 %v1321, %v1327
      %v1329 = vadd.f32 %v1328, 0.18741608
      %v1330 = vmul.f32 %v1321, %v1329
      %v1331 = vadd.f32 %v1330, 1.1283791
      %v1332 = vmul.f32 %v898, %v1331
      %v1333 = vmul.f32 %v1321, 3.8918573e-05
      %v1334 = vadd.f32 %v1333, 0.001143296
      %v1335 = vmul.f32 %v1321, %v1334
      %v1336 = vadd.f32 %v1335, 0.014752088
      %v1337 = vmul.f32 %v1321, %v1336
      %v1338 = vadd.f32 %v1337, 0.112945676
      %v1339 = vmul.f32 %v1321, %v1338
      %v1340 = vadd.f32 %v1339, 0.4994258
      %v1341 = vmul.f32 %v1321, %v1340
      %v1342 = vadd.f32 %v1341, 1.0
      %v1343 = vrcp.pop %v1342
      %v1344 = vmul.f32 %v1342, %v1343
      %v1345 = vsub.f32 1.0, %v1344
      %v1346 = vmul.f32 %v1343, %v1345
      %v1347 = vadd.f32 %v1343, %v1346
      %vm1348 = vweird.f32 %v1342
      %vm1349 = vweird.f32 %v1343
      %vm1350 = vmor %vm1348, %vm1349
      %v1351 = vsel %vm1350, %v1343, %v1347
      %v1352 = vand.u32 2147483647, %v1342
      %vm1353 = vcmp.eq.f32.partialorder %v1352, 8.507059e+37
      %v1354 = vand.u32 %v1342, 2147483648
      %v1355 = vor.u32 1.1754944e-38, %v1354
      %v1356 = vsel %vm1353, %v1355, %v1351
      %v1357 = vmul.f32 %v1332, %v1356
      %v1358 = vmin.f32 %v1357, 1.0
      %v1359 = vmax.f32 %v1358, -1.0
      %v1360 = vmul.f32 %v899, %v899
      %v1361 = vmin.f32 16.0, %v1360
      %v1362 = vmul.f32 %v1361, 2.1237322e-06
      %v1363 = vadd.f32 %v1362, 0.00028619796
      %v1364 = vmul.f32 %v1361, %v1363
      %v1365 = vadd.f32 %v1364, 0.0036580483
      %v1366 = vmul.f32 %v1361, %v1365
      %v1367 = vadd.f32 %v1366, 0.05243302
      %v1368 = vmul.f32 %v1361, %v1367
      %v1369 = vadd.f32 %v1368, 0.18741608
      %v1370 = vmul.f32 %v1361, %v1369
      %v1371 = vadd.f32 %v1370, 1.1283791
      %v1372 = vmul.f32 %v899, %v1371
      %v1373 = vmul.f32 %v1361, 3.8918573e-05
      %v1374 = vadd.f32 %v1373, 0.001143296
      %v1375 = vmul.f32 %v1361, %v1374
      %v1376 = vadd.f32 %v1375, 0.014752088
      %v1377 = vmul.f32 %v1361, %v1376
      %v1378 = vadd.f32 %v1377, 0.112945676
      %v1379 = vmul.f32 %v1361, %v1378
      %v1380 = vadd.f32 %v1379, 0.4994258
      %v1381 = vmul.f32 %v1361, %v1380
      %v1382 = vadd.f32 %v1381, 1.0
      %v1383 = vrcp.pop %v1382
      %v1384 = vmul.f32 %v1382, %v1383
      %v1385 = vsub.f32 1.0, %v1384
      %v1386 = vmul.f32 %v1383, %v1385
      %v1387 = vadd.f32 %v1383, %v1386
      %vm1388 = vweird.f32 %v1382
      %vm1389 = vweird.f32 %v1383
      %vm1390 = vmor %vm1388, %vm1389
      %v1391 = vsel %vm1390, %v1383, %v1387
      %v1392 = vand.u32 2147483647, %v1382
      %vm1393 = vcmp.eq.f32.partialorder %v1392, 8.507059e+37
      %v1394 = vand.u32 %v1382, 2147483648
      %v1395 = vor.u32 1.1754944e-38, %v1394
      %v1396 = vsel %vm1393, %v1395, %v1391
      %v1397 = vmul.f32 %v1372, %v1396
      %v1398 = vmin.f32 %v1397, 1.0
      %v1399 = vmax.f32 %v1398, -1.0
      %v1400 = vmul.f32 %v900, %v900
      %v1401 = vmin.f32 16.0, %v1400
      %v1402 = vmul.f32 %v1401, 2.1237322e-06
      %v1403 = vadd.f32 %v1402, 0.00028619796
      %v1404 = vmul.f32 %v1401, %v1403
      %v1405 = vadd.f32 %v1404, 0.0036580483
      %v1406 = vmul.f32 %v1401, %v1405
      %v1407 = vadd.f32 %v1406, 0.05243302
      %v1408 = vmul.f32 %v1401, %v1407
      %v1409 = vadd.f32 %v1408, 0.18741608
      %v1410 = vmul.f32 %v1401, %v1409
      %v1411 = vadd.f32 %v1410, 1.1283791
      %v1412 = vmul.f32 %v900, %v1411
      %v1413 = vmul.f32 %v1401, 3.8918573e-05
      %v1414 = vadd.f32 %v1413, 0.001143296
      %v1415 = vmul.f32 %v1401, %v1414
      %v1416 = vadd.f32 %v1415, 0.014752088
      %v1417 = vmul.f32 %v1401, %v1416
      %v1418 = vadd.f32 %v1417, 0.112945676
      %v1419 = vmul.f32 %v1401, %v1418
      %v1420 = vadd.f32 %v1419, 0.4994258
      %v1421 = vmul.f32 %v1401, %v1420
      %v1422 = vadd.f32 %v1421, 1.0
      %v1423 = vrcp.pop %v1422
      %v1424 = vmul.f32 %v1422, %v1423
      %v1425 = vsub.f32 1.0, %v1424
      %v1426 = vmul.f32 %v1423, %v1425
      %v1427 = vadd.f32 %v1423, %v1426
      %vm1428 = vweird.f32 %v1422
      %vm1429 = vweird.f32 %v1423
      %vm1430 = vmor %vm1428, %vm1429
      %v1431 = vsel %vm1430, %v1423, %v1427
      %v1432 = vand.u32 2147483647, %v1422
      %vm1433 = vcmp.eq.f32.partialorder %v1432, 8.507059e+37
      %v1434 = vand.u32 %v1422, 2147483648
      %v1435 = vor.u32 1.1754944e-38, %v1434
      %v1436 = vsel %vm1433, %v1435, %v1431
      %v1437 = vmul.f32 %v1412, %v1436
      %v1438 = vmin.f32 %v1437, 1.0
      %v1439 = vmax.f32 %v1438, -1.0
      %v1440 = vmul.f32 %v901, %v901
      %v1441 = vmin.f32 16.0, %v1440
      %v1442 = vmul.f32 %v1441, 2.1237322e-06
      %v1443 = vadd.f32 %v1442, 0.00028619796
      %v1444 = vmul.f32 %v1441, %v1443
      %v1445 = vadd.f32 %v1444, 0.0036580483
      %v1446 = vmul.f32 %v1441, %v1445
      %v1447 = vadd.f32 %v1446, 0.05243302
      %v1448 = vmul.f32 %v1441, %v1447
      %v1449 = vadd.f32 %v1448, 0.18741608
      %v1450 = vmul.f32 %v1441, %v1449
      %v1451 = vadd.f32 %v1450, 1.1283791
      %v1452 = vmul.f32 %v901, %v1451
      %v1453 = vmul.f32 %v1441, 3.8918573e-05
      %v1454 = vadd.f32 %v1453, 0.001143296
      %v1455 = vmul.f32 %v1441, %v1454
      %v1456 = vadd.f32 %v1455, 0.014752088
      %v1457 = vmul.f32 %v1441, %v1456
      %v1458 = vadd.f32 %v1457, 0.112945676
      %v1459 = vmul.f32 %v1441, %v1458
      %v1460 = vadd.f32 %v1459, 0.4994258
      %v1461 = vmul.f32 %v1441, %v1460
      %v1462 = vadd.f32 %v1461, 1.0
      %v1463 = vrcp.pop %v1462
      %v1464 = vmul.f32 %v1462, %v1463
      %v1465 = vsub.f32 1.0, %v1464
      %v1466 = vmul.f32 %v1463, %v1465
      %v1467 = vadd.f32 %v1463, %v1466
      %vm1468 = vweird.f32 %v1462
      %vm1469 = vweird.f32 %v1463
      %vm1470 = vmor %vm1468, %vm1469
      %v1471 = vsel %vm1470, %v1463, %v1467
      %v1472 = vand.u32 2147483647, %v1462
      %vm1473 = vcmp.eq.f32.partialorder %v1472, 8.507059e+37
      %v1474 = vand.u32 %v1462, 2147483648
      %v1475 = vor.u32 1.1754944e-38, %v1474
      %v1476 = vsel %vm1473, %v1475, %v1471
      %v1477 = vmul.f32 %v1452, %v1476
      %v1478 = vmin.f32 %v1477, 1.0
      %v1479 = vmax.f32 %v1478, -1.0
      %v1480 = vmul.f32 %v902, %v902
      %v1481 = vmin.f32 16.0, %v1480
      %v1482 = vmul.f32 %v1481, 2.1237322e-06
      %v1483 = vadd.f32 %v1482, 0.00028619796
      %v1484 = vmul.f32 %v1481, %v1483
      %v1485 = vadd.f32 %v1484, 0.0036580483
      %v1486 = vmul.f32 %v1481, %v1485
      %v1487 = vadd.f32 %v1486, 0.05243302
      %v1488 = vmul.f32 %v1481, %v1487
      %v1489 = vadd.f32 %v1488, 0.18741608
      %v1490 = vmul.f32 %v1481, %v1489
      %v1491 = vadd.f32 %v1490, 1.1283791
      %v1492 = vmul.f32 %v902, %v1491
      %v1493 = vmul.f32 %v1481, 3.8918573e-05
      %v1494 = vadd.f32 %v1493, 0.001143296
      %v1495 = vmul.f32 %v1481, %v1494
      %v1496 = vadd.f32 %v1495, 0.014752088
      %v1497 = vmul.f32 %v1481, %v1496
      %v1498 = vadd.f32 %v1497, 0.112945676
      %v1499 = vmul.f32 %v1481, %v1498
      %v1500 = vadd.f32 %v1499, 0.4994258
      %v1501 = vmul.f32 %v1481, %v1500
      %v1502 = vadd.f32 %v1501, 1.0
      %v1503 = vrcp.pop %v1502
      %v1504 = vmul.f32 %v1502, %v1503
      %v1505 = vsub.f32 1.0, %v1504
      %v1506 = vmul.f32 %v1503, %v1505
      %v1507 = vadd.f32 %v1503, %v1506
      %vm1508 = vweird.f32 %v1502
      %vm1509 = vweird.f32 %v1503
      %vm1510 = vmor %vm1508, %vm1509
      %v1511 = vsel %vm1510, %v1503, %v1507
      %v1512 = vand.u32 2147483647, %v1502
      %vm1513 = vcmp.eq.f32.partialorder %v1512, 8.507059e+37
      %v1514 = vand.u32 %v1502, 2147483648
      %v1515 = vor.u32 1.1754944e-38, %v1514
      %v1516 = vsel %vm1513, %v1515, %v1511
      %v1517 = vmul.f32 %v1492, %v1516
      %v1518 = vmin.f32 %v1517, 1.0
      %v1519 = vmax.f32 %v1518, -1.0
      %v1520 = vmul.f32 %v903, %v903
      %v1521 = vmin.f32 16.0, %v1520
      %v1522 = vmul.f32 %v1521, 2.1237322e-06
      %v1523 = vadd.f32 %v1522, 0.00028619796
      %v1524 = vmul.f32 %v1521, %v1523
      %v1525 = vadd.f32 %v1524, 0.0036580483
      %v1526 = vmul.f32 %v1521, %v1525
      %v1527 = vadd.f32 %v1526, 0.05243302
      %v1528 = vmul.f32 %v1521, %v1527
      %v1529 = vadd.f32 %v1528, 0.18741608
      %v1530 = vmul.f32 %v1521, %v1529
      %v1531 = vadd.f32 %v1530, 1.1283791
      %v1532 = vmul.f32 %v903, %v1531
      %v1533 = vmul.f32 %v1521, 3.8918573e-05
      %v1534 = vadd.f32 %v1533, 0.001143296
      %v1535 = vmul.f32 %v1521, %v1534
      %v1536 = vadd.f32 %v1535, 0.014752088
      %v1537 = vmul.f32 %v1521, %v1536
      %v1538 = vadd.f32 %v1537, 0.112945676
      %v1539 = vmul.f32 %v1521, %v1538
      %v1540 = vadd.f32 %v1539, 0.4994258
      %v1541 = vmul.f32 %v1521, %v1540
      %v1542 = vadd.f32 %v1541, 1.0
      %v1543 = vrcp.pop %v1542
      %v1544 = vmul.f32 %v1542, %v1543
      %v1545 = vsub.f32 1.0, %v1544
      %v1546 = vmul.f32 %v1543, %v1545
      %v1547 = vadd.f32 %v1543, %v1546
      %vm1548 = vweird.f32 %v1542
      %vm1549 = vweird.f32 %v1543
      %vm1550 = vmor %vm1548, %vm1549
      %v1551 = vsel %vm1550, %v1543, %v1547
      %v1552 = vand.u32 2147483647, %v1542
      %vm1553 = vcmp.eq.f32.partialorder %v1552, 8.507059e+37
      %v1554 = vand.u32 %v1542, 2147483648
      %v1555 = vor.u32 1.1754944e-38, %v1554
      %v1556 = vsel %vm1553, %v1555, %v1551
      %v1557 = vmul.f32 %v1532, %v1556
      %v1558 = vmin.f32 %v1557, 1.0
      %v1559 = vmax.f32 %v1558, -1.0
      %v1560 = vmul.f32 %v904, %v904
      %v1561 = vmin.f32 16.0, %v1560
      %v1562 = vmul.f32 %v1561, 2.1237322e-06
      %v1563 = vadd.f32 %v1562, 0.00028619796
      %v1564 = vmul.f32 %v1561, %v1563
      %v1565 = vadd.f32 %v1564, 0.0036580483
      %v1566 = vmul.f32 %v1561, %v1565
      %v1567 = vadd.f32 %v1566, 0.05243302
      %v1568 = vmul.f32 %v1561, %v1567
      %v1569 = vadd.f32 %v1568, 0.18741608
      %v1570 = vmul.f32 %v1561, %v1569
      %v1571 = vadd.f32 %v1570, 1.1283791
      %v1572 = vmul.f32 %v904, %v1571
      %v1573 = vmul.f32 %v1561, 3.8918573e-05
      %v1574 = vadd.f32 %v1573, 0.001143296
      %v1575 = vmul.f32 %v1561, %v1574
      %v1576 = vadd.f32 %v1575, 0.014752088
      %v1577 = vmul.f32 %v1561, %v1576
      %v1578 = vadd.f32 %v1577, 0.112945676
      %v1579 = vmul.f32 %v1561, %v1578
      %v1580 = vadd.f32 %v1579, 0.4994258
      %v1581 = vmul.f32 %v1561, %v1580
      %v1582 = vadd.f32 %v1581, 1.0
      %v1583 = vrcp.pop %v1582
      %v1584 = vmul.f32 %v1582, %v1583
      %v1585 = vsub.f32 1.0, %v1584
      %v1586 = vmul.f32 %v1583, %v1585
      %v1587 = vadd.f32 %v1583, %v1586
      %vm1588 = vweird.f32 %v1582
      %vm1589 = vweird.f32 %v1583
      %vm1590 = vmor %vm1588, %vm1589
      %v1591 = vsel %vm1590, %v1583, %v1587
      %v1592 = vand.u32 2147483647, %v1582
      %vm1593 = vcmp.eq.f32.partialorder %v1592, 8.507059e+37
      %v1594 = vand.u32 %v1582, 2147483648
      %v1595 = vor.u32 1.1754944e-38, %v1594
      %v1596 = vsel %vm1593, %v1595, %v1591
      %v1597 = vmul.f32 %v1572, %v1596
      %v1598 = vmin.f32 %v1597, 1.0
      %v1599 = vmax.f32 %v1598, -1.0
      %v1600 = vmul.f32 %v905, %v905
      %v1601 = vmin.f32 16.0, %v1600
      %v1602 = vmul.f32 %v1601, 2.1237322e-06
      %v1603 = vadd.f32 %v1602, 0.00028619796
      %v1604 = vmul.f32 %v1601, %v1603
      %v1605 = vadd.f32 %v1604, 0.0036580483
      %v1606 = vmul.f32 %v1601, %v1605
      %v1607 = vadd.f32 %v1606, 0.05243302
      %v1608 = vmul.f32 %v1601, %v1607
      %v1609 = vadd.f32 %v1608, 0.18741608
      %v1610 = vmul.f32 %v1601, %v1609
      %v1611 = vadd.f32 %v1610, 1.1283791
      %v1612 = vmul.f32 %v905, %v1611
      %v1613 = vmul.f32 %v1601, 3.8918573e-05
      %v1614 = vadd.f32 %v1613, 0.001143296
      %v1615 = vmul.f32 %v1601, %v1614
      %v1616 = vadd.f32 %v1615, 0.014752088
      %v1617 = vmul.f32 %v1601, %v1616
      %v1618 = vadd.f32 %v1617, 0.112945676
      %v1619 = vmul.f32 %v1601, %v1618
      %v1620 = vadd.f32 %v1619, 0.4994258
      %v1621 = vmul.f32 %v1601, %v1620
      %v1622 = vadd.f32 %v1621, 1.0
      %v1623 = vrcp.pop %v1622
      %v1624 = vmul.f32 %v1622, %v1623
      %v1625 = vsub.f32 1.0, %v1624
      %v1626 = vmul.f32 %v1623, %v1625
      %v1627 = vadd.f32 %v1623, %v1626
      %vm1628 = vweird.f32 %v1622
      %vm1629 = vweird.f32 %v1623
      %vm1630 = vmor %vm1628, %vm1629
      %v1631 = vsel %vm1630, %v1623, %v1627
      %v1632 = vand.u32 2147483647, %v1622
      %vm1633 = vcmp.eq.f32.partialorder %v1632, 8.507059e+37
      %v1634 = vand.u32 %v1622, 2147483648
      %v1635 = vor.u32 1.1754944e-38, %v1634
      %v1636 = vsel %vm1633, %v1635, %v1631
      %v1637 = vmul.f32 %v1612, %v1636
      %v1638 = vmin.f32 %v1637, 1.0
      %v1639 = vmax.f32 %v1638, -1.0
      %v1640 = vmul.f32 %v906, %v906
      %v1641 = vmin.f32 16.0, %v1640
      %v1642 = vmul.f32 %v1641, 2.1237322e-06
      %v1643 = vadd.f32 %v1642, 0.00028619796
      %v1644 = vmul.f32 %v1641, %v1643
      %v1645 = vadd.f32 %v1644, 0.0036580483
      %v1646 = vmul.f32 %v1641, %v1645
      %v1647 = vadd.f32 %v1646, 0.05243302
      %v1648 = vmul.f32 %v1641, %v1647
      %v1649 = vadd.f32 %v1648, 0.18741608
      %v1650 = vmul.f32 %v1641, %v1649
      %v1651 = vadd.f32 %v1650, 1.1283791
      %v1652 = vmul.f32 %v906, %v1651
      %v1653 = vmul.f32 %v1641, 3.8918573e-05
      %v1654 = vadd.f32 %v1653, 0.001143296
      %v1655 = vmul.f32 %v1641, %v1654
      %v1656 = vadd.f32 %v1655, 0.014752088
      %v1657 = vmul.f32 %v1641, %v1656
      %v1658 = vadd.f32 %v1657, 0.112945676
      %v1659 = vmul.f32 %v1641, %v1658
      %v1660 = vadd.f32 %v1659, 0.4994258
      %v1661 = vmul.f32 %v1641, %v1660
      %v1662 = vadd.f32 %v1661, 1.0
      %v1663 = vrcp.pop %v1662
      %v1664 = vmul.f32 %v1662, %v1663
      %v1665 = vsub.f32 1.0, %v1664
      %v1666 = vmul.f32 %v1663, %v1665
      %v1667 = vadd.f32 %v1663, %v1666
      %vm1668 = vweird.f32 %v1662
      %vm1669 = vweird.f32 %v1663
      %vm1670 = vmor %vm1668, %vm1669
      %v1671 = vsel %vm1670, %v1663, %v1667
      %v1672 = vand.u32 2147483647, %v1662
      %vm1673 = vcmp.eq.f32.partialorder %v1672, 8.507059e+37
      %v1674 = vand.u32 %v1662, 2147483648
      %v1675 = vor.u32 1.1754944e-38, %v1674
      %v1676 = vsel %vm1673, %v1675, %v1671
      %v1677 = vmul.f32 %v1652, %v1676
      %v1678 = vmin.f32 %v1677, 1.0
      %v1679 = vmax.f32 %v1678, -1.0
      %v1680 = vmul.f32 %v907, %v907
      %v1681 = vmin.f32 16.0, %v1680
      %v1682 = vmul.f32 %v1681, 2.1237322e-06
      %v1683 = vadd.f32 %v1682, 0.00028619796
      %v1684 = vmul.f32 %v1681, %v1683
      %v1685 = vadd.f32 %v1684, 0.0036580483
      %v1686 = vmul.f32 %v1681, %v1685
      %v1687 = vadd.f32 %v1686, 0.05243302
      %v1688 = vmul.f32 %v1681, %v1687
      %v1689 = vadd.f32 %v1688, 0.18741608
      %v1690 = vmul.f32 %v1681, %v1689
      %v1691 = vadd.f32 %v1690, 1.1283791
      %v1692 = vmul.f32 %v907, %v1691
      %v1693 = vmul.f32 %v1681, 3.8918573e-05
      %v1694 = vadd.f32 %v1693, 0.001143296
      %v1695 = vmul.f32 %v1681, %v1694
      %v1696 = vadd.f32 %v1695, 0.014752088
      %v1697 = vmul.f32 %v1681, %v1696
      %v1698 = vadd.f32 %v1697, 0.112945676
      %v1699 = vmul.f32 %v1681, %v1698
      %v1700 = vadd.f32 %v1699, 0.4994258
      %v1701 = vmul.f32 %v1681, %v1700
      %v1702 = vadd.f32 %v1701, 1.0
      %v1703 = vrcp.pop %v1702
      %v1704 = vmul.f32 %v1702, %v1703
      %v1705 = vsub.f32 1.0, %v1704
      %v1706 = vmul.f32 %v1703, %v1705
      %v1707 = vadd.f32 %v1703, %v1706
      %vm1708 = vweird.f32 %v1702
      %vm1709 = vweird.f32 %v1703
      %vm1710 = vmor %vm1708, %vm1709
      %v1711 = vsel %vm1710, %v1703, %v1707
      %v1712 = vand.u32 2147483647, %v1702
      %vm1713 = vcmp.eq.f32.partialorder %v1712, 8.507059e+37
      %v1714 = vand.u32 %v1702, 2147483648
      %v1715 = vor.u32 1.1754944e-38, %v1714
      %v1716 = vsel %vm1713, %v1715, %v1711
      %v1717 = vmul.f32 %v1692, %v1716
      %v1718 = vmin.f32 %v1717, 1.0
      %v1719 = vmax.f32 %v1718, -1.0
      %v1720 = vmul.f32 %v908, %v908
      %v1721 = vmin.f32 16.0, %v1720
      %v1722 = vmul.f32 %v1721, 2.1237322e-06
      %v1723 = vadd.f32 %v1722, 0.00028619796
      %v1724 = vmul.f32 %v1721, %v1723
      %v1725 = vadd.f32 %v1724, 0.0036580483
      %v1726 = vmul.f32 %v1721, %v1725
      %v1727 = vadd.f32 %v1726, 0.05243302
      %v1728 = vmul.f32 %v1721, %v1727
      %v1729 = vadd.f32 %v1728, 0.18741608
      %v1730 = vmul.f32 %v1721, %v1729
      %v1731 = vadd.f32 %v1730, 1.1283791
      %v1732 = vmul.f32 %v908, %v1731
      %v1733 = vmul.f32 %v1721, 3.8918573e-05
      %v1734 = vadd.f32 %v1733, 0.001143296
      %v1735 = vmul.f32 %v1721, %v1734
      %v1736 = vadd.f32 %v1735, 0.014752088
      %v1737 = vmul.f32 %v1721, %v1736
      %v1738 = vadd.f32 %v1737, 0.112945676
      %v1739 = vmul.f32 %v1721, %v1738
      %v1740 = vadd.f32 %v1739, 0.4994258
      %v1741 = vmul.f32 %v1721, %v1740
      %v1742 = vadd.f32 %v1741, 1.0
      %v1743 = vrcp.pop %v1742
      %v1744 = vmul.f32 %v1742, %v1743
      %v1745 = vsub.f32 1.0, %v1744
      %v1746 = vmul.f32 %v1743, %v1745
      %v1747 = vadd.f32 %v1743, %v1746
      %vm1748 = vweird.f32 %v1742
      %vm1749 = vweird.f32 %v1743
      %vm1750 = vmor %vm1748, %vm1749
      %v1751 = vsel %vm1750, %v1743, %v1747
      %v1752 = vand.u32 2147483647, %v1742
      %vm1753 = vcmp.eq.f32.partialorder %v1752, 8.507059e+37
      %v1754 = vand.u32 %v1742, 2147483648
      %v1755 = vor.u32 1.1754944e-38, %v1754
      %v1756 = vsel %vm1753, %v1755, %v1751
      %v1757 = vmul.f32 %v1732, %v1756
      %v1758 = vmin.f32 %v1757, 1.0
      %v1759 = vmax.f32 %v1758, -1.0
      %v1760 = vmul.f32 %v909, %v909
      %v1761 = vmin.f32 16.0, %v1760
      %v1762 = vmul.f32 %v1761, 2.1237322e-06
      %v1763 = vadd.f32 %v1762, 0.00028619796
      %v1764 = vmul.f32 %v1761, %v1763
      %v1765 = vadd.f32 %v1764, 0.0036580483
      %v1766 = vmul.f32 %v1761, %v1765
      %v1767 = vadd.f32 %v1766, 0.05243302
      %v1768 = vmul.f32 %v1761, %v1767
      %v1769 = vadd.f32 %v1768, 0.18741608
      %v1770 = vmul.f32 %v1761, %v1769
      %v1771 = vadd.f32 %v1770, 1.1283791
      %v1772 = vmul.f32 %v909, %v1771
      %v1773 = vmul.f32 %v1761, 3.8918573e-05
      %v1774 = vadd.f32 %v1773, 0.001143296
      %v1775 = vmul.f32 %v1761, %v1774
      %v1776 = vadd.f32 %v1775, 0.014752088
      %v1777 = vmul.f32 %v1761, %v1776
      %v1778 = vadd.f32 %v1777, 0.112945676
      %v1779 = vmul.f32 %v1761, %v1778
      %v1780 = vadd.f32 %v1779, 0.4994258
      %v1781 = vmul.f32 %v1761, %v1780
      %v1782 = vadd.f32 %v1781, 1.0
      %v1783 = vrcp.pop %v1782
      %v1784 = vmul.f32 %v1782, %v1783
      %v1785 = vsub.f32 1.0, %v1784
      %v1786 = vmul.f32 %v1783, %v1785
      %v1787 = vadd.f32 %v1783, %v1786
      %vm1788 = vweird.f32 %v1782
      %vm1789 = vweird.f32 %v1783
      %vm1790 = vmor %vm1788, %vm1789
      %v1791 = vsel %vm1790, %v1783, %v1787
      %v1792 = vand.u32 2147483647, %v1782
      %vm1793 = vcmp.eq.f32.partialorder %v1792, 8.507059e+37
      %v1794 = vand.u32 %v1782, 2147483648
      %v1795 = vor.u32 1.1754944e-38, %v1794
      %v1796 = vsel %vm1793, %v1795, %v1791
      %v1797 = vmul.f32 %v1772, %v1796
      %v1798 = vmin.f32 %v1797, 1.0
      %v1799 = vmax.f32 %v1798, -1.0
      %v1800 = vmul.f32 %v910, %v910
      %v1801 = vmin.f32 16.0, %v1800
      %v1802 = vmul.f32 %v1801, 2.1237322e-06
      %v1803 = vadd.f32 %v1802, 0.00028619796
      %v1804 = vmul.f32 %v1801, %v1803
      %v1805 = vadd.f32 %v1804, 0.0036580483
      %v1806 = vmul.f32 %v1801, %v1805
      %v1807 = vadd.f32 %v1806, 0.05243302
      %v1808 = vmul.f32 %v1801, %v1807
      %v1809 = vadd.f32 %v1808, 0.18741608
      %v1810 = vmul.f32 %v1801, %v1809
      %v1811 = vadd.f32 %v1810, 1.1283791
      %v1812 = vmul.f32 %v910, %v1811
      %v1813 = vmul.f32 %v1801, 3.8918573e-05
      %v1814 = vadd.f32 %v1813, 0.001143296
      %v1815 = vmul.f32 %v1801, %v1814
      %v1816 = vadd.f32 %v1815, 0.014752088
      %v1817 = vmul.f32 %v1801, %v1816
      %v1818 = vadd.f32 %v1817, 0.112945676
      %v1819 = vmul.f32 %v1801, %v1818
      %v1820 = vadd.f32 %v1819, 0.4994258
      %v1821 = vmul.f32 %v1801, %v1820
      %v1822 = vadd.f32 %v1821, 1.0
      %v1823 = vrcp.pop %v1822
      %v1824 = vmul.f32 %v1822, %v1823
      %v1825 = vsub.f32 1.0, %v1824
      %v1826 = vmul.f32 %v1823, %v1825
      %v1827 = vadd.f32 %v1823, %v1826
      %vm1828 = vweird.f32 %v1822
      %vm1829 = vweird.f32 %v1823
      %vm1830 = vmor %vm1828, %vm1829
      %v1831 = vsel %vm1830, %v1823, %v1827
      %v1832 = vand.u32 2147483647, %v1822
      %vm1833 = vcmp.eq.f32.partialorder %v1832, 8.507059e+37
      %v1834 = vand.u32 %v1822, 2147483648
      %v1835 = vor.u32 1.1754944e-38, %v1834
      %v1836 = vsel %vm1833, %v1835, %v1831
      %v1837 = vmul.f32 %v1812, %v1836
      %v1838 = vmin.f32 %v1837, 1.0
      %v1839 = vmax.f32 %v1838, -1.0
      %v1840 = vmul.f32 %v911, %v911
      %v1841 = vmin.f32 16.0, %v1840
      %v1842 = vmul.f32 %v1841, 2.1237322e-06
      %v1843 = vadd.f32 %v1842, 0.00028619796
      %v1844 = vmul.f32 %v1841, %v1843
      %v1845 = vadd.f32 %v1844, 0.0036580483
      %v1846 = vmul.f32 %v1841, %v1845
      %v1847 = vadd.f32 %v1846, 0.05243302
      %v1848 = vmul.f32 %v1841, %v1847
      %v1849 = vadd.f32 %v1848, 0.18741608
      %v1850 = vmul.f32 %v1841, %v1849
      %v1851 = vadd.f32 %v1850, 1.1283791
      %v1852 = vmul.f32 %v911, %v1851
      %v1853 = vmul.f32 %v1841, 3.8918573e-05
      %v1854 = vadd.f32 %v1853, 0.001143296
      %v1855 = vmul.f32 %v1841, %v1854
      %v1856 = vadd.f32 %v1855, 0.014752088
      %v1857 = vmul.f32 %v1841, %v1856
      %v1858 = vadd.f32 %v1857, 0.112945676
      %v1859 = vmul.f32 %v1841, %v1858
      %v1860 = vadd.f32 %v1859, 0.4994258
      %v1861 = vmul.f32 %v1841, %v1860
      %v1862 = vadd.f32 %v1861, 1.0
      %v1863 = vrcp.pop %v1862
      %v1864 = vmul.f32 %v1862, %v1863
      %v1865 = vsub.f32 1.0, %v1864
      %v1866 = vmul.f32 %v1863, %v1865
      %v1867 = vadd.f32 %v1863, %v1866
      %vm1868 = vweird.f32 %v1862
      %vm1869 = vweird.f32 %v1863
      %vm1870 = vmor %vm1868, %vm1869
      %v1871 = vsel %vm1870, %v1863, %v1867
      %v1872 = vand.u32 2147483647, %v1862
      %vm1873 = vcmp.eq.f32.partialorder %v1872, 8.507059e+37
      %v1874 = vand.u32 %v1862, 2147483648
      %v1875 = vor.u32 1.1754944e-38, %v1874
      %v1876 = vsel %vm1873, %v1875, %v1871
      %v1877 = vmul.f32 %v1852, %v1876
      %v1878 = vmin.f32 %v1877, 1.0
      %v1879 = vmax.f32 %v1878, -1.0
      %v1880 = vmul.f32 %v912, %v912
      %v1881 = vmin.f32 16.0, %v1880
      %v1882 = vmul.f32 %v1881, 2.1237322e-06
      %v1883 = vadd.f32 %v1882, 0.00028619796
      %v1884 = vmul.f32 %v1881, %v1883
      %v1885 = vadd.f32 %v1884, 0.0036580483
      %v1886 = vmul.f32 %v1881, %v1885
      %v1887 = vadd.f32 %v1886, 0.05243302
      %v1888 = vmul.f32 %v1881, %v1887
      %v1889 = vadd.f32 %v1888, 0.18741608
      %v1890 = vmul.f32 %v1881, %v1889
      %v1891 = vadd.f32 %v1890, 1.1283791
      %v1892 = vmul.f32 %v912, %v1891
      %v1893 = vmul.f32 %v1881, 3.8918573e-05
      %v1894 = vadd.f32 %v1893, 0.001143296
      %v1895 = vmul.f32 %v1881, %v1894
      %v1896 = vadd.f32 %v1895, 0.014752088
      %v1897 = vmul.f32 %v1881, %v1896
      %v1898 = vadd.f32 %v1897, 0.112945676
      %v1899 = vmul.f32 %v1881, %v1898
      %v1900 = vadd.f32 %v1899, 0.4994258
      %v1901 = vmul.f32 %v1881, %v1900
      %v1902 = vadd.f32 %v1901, 1.0
      %v1903 = vrcp.pop %v1902
      %v1904 = vmul.f32 %v1902, %v1903
      %v1905 = vsub.f32 1.0, %v1904
      %v1906 = vmul.f32 %v1903, %v1905
      %v1907 = vadd.f32 %v1903, %v1906
      %vm1908 = vweird.f32 %v1902
      %vm1909 = vweird.f32 %v1903
      %vm1910 = vmor %vm1908, %vm1909
      %v1911 = vsel %vm1910, %v1903, %v1907
      %v1912 = vand.u32 2147483647, %v1902
      %vm1913 = vcmp.eq.f32.partialorder %v1912, 8.507059e+37
      %v1914 = vand.u32 %v1902, 2147483648
      %v1915 = vor.u32 1.1754944e-38, %v1914
      %v1916 = vsel %vm1913, %v1915, %v1911
      %v1917 = vmul.f32 %v1892, %v1916
      %v1918 = vmin.f32 %v1917, 1.0
      %v1919 = vmax.f32 %v1918, -1.0
      %v1920 = vmul.f32 %v913, %v913
      %v1921 = vmin.f32 16.0, %v1920
      %v1922 = vmul.f32 %v1921, 2.1237322e-06
      %v1923 = vadd.f32 %v1922, 0.00028619796
      %v1924 = vmul.f32 %v1921, %v1923
      %v1925 = vadd.f32 %v1924, 0.0036580483
      %v1926 = vmul.f32 %v1921, %v1925
      %v1927 = vadd.f32 %v1926, 0.05243302
      %v1928 = vmul.f32 %v1921, %v1927
      %v1929 = vadd.f32 %v1928, 0.18741608
      %v1930 = vmul.f32 %v1921, %v1929
      %v1931 = vadd.f32 %v1930, 1.1283791
      %v1932 = vmul.f32 %v913, %v1931
      %v1933 = vmul.f32 %v1921, 3.8918573e-05
      %v1934 = vadd.f32 %v1933, 0.001143296
      %v1935 = vmul.f32 %v1921, %v1934
      %v1936 = vadd.f32 %v1935, 0.014752088
      %v1937 = vmul.f32 %v1921, %v1936
      %v1938 = vadd.f32 %v1937, 0.112945676
      %v1939 = vmul.f32 %v1921, %v1938
      %v1940 = vadd.f32 %v1939, 0.4994258
      %v1941 = vmul.f32 %v1921, %v1940
      %v1942 = vadd.f32 %v1941, 1.0
      %v1943 = vrcp.pop %v1942
      %v1944 = vmul.f32 %v1942, %v1943
      %v1945 = vsub.f32 1.0, %v1944
      %v1946 = vmul.f32 %v1943, %v1945
      %v1947 = vadd.f32 %v1943, %v1946
      %vm1948 = vweird.f32 %v1942
      %vm1949 = vweird.f32 %v1943
      %vm1950 = vmor %vm1948, %vm1949
      %v1951 = vsel %vm1950, %v1943, %v1947
      %v1952 = vand.u32 2147483647, %v1942
      %vm1953 = vcmp.eq.f32.partialorder %v1952, 8.507059e+37
      %v1954 = vand.u32 %v1942, 2147483648
      %v1955 = vor.u32 1.1754944e-38, %v1954
      %v1956 = vsel %vm1953, %v1955, %v1951
      %v1957 = vmul.f32 %v1932, %v1956
      %v1958 = vmin.f32 %v1957, 1.0
      %v1959 = vmax.f32 %v1958, -1.0
      %v1960 = vmul.f32 %v914, %v914
      %v1961 = vmin.f32 16.0, %v1960
      %v1962 = vmul.f32 %v1961, 2.1237322e-06
      %v1963 = vadd.f32 %v1962, 0.00028619796
      %v1964 = vmul.f32 %v1961, %v1963
      %v1965 = vadd.f32 %v1964, 0.0036580483
      %v1966 = vmul.f32 %v1961, %v1965
      %v1967 = vadd.f32 %v1966, 0.05243302
      %v1968 = vmul.f32 %v1961, %v1967
      %v1969 = vadd.f32 %v1968, 0.18741608
      %v1970 = vmul.f32 %v1961, %v1969
      %v1971 = vadd.f32 %v1970, 1.1283791
      %v1972 = vmul.f32 %v914, %v1971
      %v1973 = vmul.f32 %v1961, 3.8918573e-05
      %v1974 = vadd.f32 %v1973, 0.001143296
      %v1975 = vmul.f32 %v1961, %v1974
      %v1976 = vadd.f32 %v1975, 0.014752088
      %v1977 = vmul.f32 %v1961, %v1976
      %v1978 = vadd.f32 %v1977, 0.112945676
      %v1979 = vmul.f32 %v1961, %v1978
      %v1980 = vadd.f32 %v1979, 0.4994258
      %v1981 = vmul.f32 %v1961, %v1980
      %v1982 = vadd.f32 %v1981, 1.0
      %v1983 = vrcp.pop %v1982
      %v1984 = vmul.f32 %v1982, %v1983
      %v1985 = vsub.f32 1.0, %v1984
      %v1986 = vmul.f32 %v1983, %v1985
      %v1987 = vadd.f32 %v1983, %v1986
      %vm1988 = vweird.f32 %v1982
      %vm1989 = vweird.f32 %v1983
      %vm1990 = vmor %vm1988, %vm1989
      %v1991 = vsel %vm1990, %v1983, %v1987
      %v1992 = vand.u32 2147483647, %v1982
      %vm1993 = vcmp.eq.f32.partialorder %v1992, 8.507059e+37
      %v1994 = vand.u32 %v1982, 2147483648
      %v1995 = vor.u32 1.1754944e-38, %v1994
      %v1996 = vsel %vm1993, %v1995, %v1991
      %v1997 = vmul.f32 %v1972, %v1996
      %v1998 = vmin.f32 %v1997, 1.0
      %v1999 = vmax.f32 %v1998, -1.0
      %v2000 = vmul.f32 %v915, %v915
      %v2001 = vmin.f32 16.0, %v2000
      %v2002 = vmul.f32 %v2001, 2.1237322e-06
      %v2003 = vadd.f32 %v2002, 0.00028619796
      %v2004 = vmul.f32 %v2001, %v2003
      %v2005 = vadd.f32 %v2004, 0.0036580483
      %v2006 = vmul.f32 %v2001, %v2005
      %v2007 = vadd.f32 %v2006, 0.05243302
      %v2008 = vmul.f32 %v2001, %v2007
      %v2009 = vadd.f32 %v2008, 0.18741608
      %v2010 = vmul.f32 %v2001, %v2009
      %v2011 = vadd.f32 %v2010, 1.1283791
      %v2012 = vmul.f32 %v915, %v2011
      %v2013 = vmul.f32 %v2001, 3.8918573e-05
      %v2014 = vadd.f32 %v2013, 0.001143296
      %v2015 = vmul.f32 %v2001, %v2014
      %v2016 = vadd.f32 %v2015, 0.014752088
      %v2017 = vmul.f32 %v2001, %v2016
      %v2018 = vadd.f32 %v2017, 0.112945676
      %v2019 = vmul.f32 %v2001, %v2018
      %v2020 = vadd.f32 %v2019, 0.4994258
      %v2021 = vmul.f32 %v2001, %v2020
      %v2022 = vadd.f32 %v2021, 1.0
      %v2023 = vrcp.pop %v2022
      %v2024 = vmul.f32 %v2022, %v2023
      %v2025 = vsub.f32 1.0, %v2024
      %v2026 = vmul.f32 %v2023, %v2025
      %v2027 = vadd.f32 %v2023, %v2026
      %vm2028 = vweird.f32 %v2022
      %vm2029 = vweird.f32 %v2023
      %vm2030 = vmor %vm2028, %vm2029
      %v2031 = vsel %vm2030, %v2023, %v2027
      %v2032 = vand.u32 2147483647, %v2022
      %vm2033 = vcmp.eq.f32.partialorder %v2032, 8.507059e+37
      %v2034 = vand.u32 %v2022, 2147483648
      %v2035 = vor.u32 1.1754944e-38, %v2034
      %v2036 = vsel %vm2033, %v2035, %v2031
      %v2037 = vmul.f32 %v2012, %v2036
      %v2038 = vmin.f32 %v2037, 1.0
      %v2039 = vmax.f32 %v2038, -1.0
      %v2040 = vmul.f32 %v916, %v916
      %v2041 = vmin.f32 16.0, %v2040
      %v2042 = vmul.f32 %v2041, 2.1237322e-06
      %v2043 = vadd.f32 %v2042, 0.00028619796
      %v2044 = vmul.f32 %v2041, %v2043
      %v2045 = vadd.f32 %v2044, 0.0036580483
      %v2046 = vmul.f32 %v2041, %v2045
      %v2047 = vadd.f32 %v2046, 0.05243302
      %v2048 = vmul.f32 %v2041, %v2047
      %v2049 = vadd.f32 %v2048, 0.18741608
      %v2050 = vmul.f32 %v2041, %v2049
      %v2051 = vadd.f32 %v2050, 1.1283791
      %v2052 = vmul.f32 %v916, %v2051
      %v2053 = vmul.f32 %v2041, 3.8918573e-05
      %v2054 = vadd.f32 %v2053, 0.001143296
      %v2055 = vmul.f32 %v2041, %v2054
      %v2056 = vadd.f32 %v2055, 0.014752088
      %v2057 = vmul.f32 %v2041, %v2056
      %v2058 = vadd.f32 %v2057, 0.112945676
      %v2059 = vmul.f32 %v2041, %v2058
      %v2060 = vadd.f32 %v2059, 0.4994258
      %v2061 = vmul.f32 %v2041, %v2060
      %v2062 = vadd.f32 %v2061, 1.0
      %v2063 = vrcp.pop %v2062
      %v2064 = vmul.f32 %v2062, %v2063
      %v2065 = vsub.f32 1.0, %v2064
      %v2066 = vmul.f32 %v2063, %v2065
      %v2067 = vadd.f32 %v2063, %v2066
      %vm2068 = vweird.f32 %v2062
      %vm2069 = vweird.f32 %v2063
      %vm2070 = vmor %vm2068, %vm2069
      %v2071 = vsel %vm2070, %v2063, %v2067
      %v2072 = vand.u32 2147483647, %v2062
      %vm2073 = vcmp.eq.f32.partialorder %v2072, 8.507059e+37
      %v2074 = vand.u32 %v2062, 2147483648
      %v2075 = vor.u32 1.1754944e-38, %v2074
      %v2076 = vsel %vm2073, %v2075, %v2071
      %v2077 = vmul.f32 %v2052, %v2076
      %v2078 = vmin.f32 %v2077, 1.0
      %v2079 = vmax.f32 %v2078, -1.0
      %v2080 = vmul.f32 %v917, %v917
      %v2081 = vmin.f32 16.0, %v2080
      %v2082 = vmul.f32 %v2081, 2.1237322e-06
      %v2083 = vadd.f32 %v2082, 0.00028619796
      %v2084 = vmul.f32 %v2081, %v2083
      %v2085 = vadd.f32 %v2084, 0.0036580483
      %v2086 = vmul.f32 %v2081, %v2085
      %v2087 = vadd.f32 %v2086, 0.05243302
      %v2088 = vmul.f32 %v2081, %v2087
      %v2089 = vadd.f32 %v2088, 0.18741608
      %v2090 = vmul.f32 %v2081, %v2089
      %v2091 = vadd.f32 %v2090, 1.1283791
      %v2092 = vmul.f32 %v917, %v2091
      %v2093 = vmul.f32 %v2081, 3.8918573e-05
      %v2094 = vadd.f32 %v2093, 0.001143296
      %v2095 = vmul.f32 %v2081, %v2094
      %v2096 = vadd.f32 %v2095, 0.014752088
      %v2097 = vmul.f32 %v2081, %v2096
      %v2098 = vadd.f32 %v2097, 0.112945676
      %v2099 = vmul.f32 %v2081, %v2098
      %v2100 = vadd.f32 %v2099, 0.4994258
      %v2101 = vmul.f32 %v2081, %v2100
      %v2102 = vadd.f32 %v2101, 1.0
      %v2103 = vrcp.pop %v2102
      %v2104 = vmul.f32 %v2102, %v2103
      %v2105 = vsub.f32 1.0, %v2104
      %v2106 = vmul.f32 %v2103, %v2105
      %v2107 = vadd.f32 %v2103, %v2106
      %vm2108 = vweird.f32 %v2102
      %vm2109 = vweird.f32 %v2103
      %vm2110 = vmor %vm2108, %vm2109
      %v2111 = vsel %vm2110, %v2103, %v2107
      %v2112 = vand.u32 2147483647, %v2102
      %vm2113 = vcmp.eq.f32.partialorder %v2112, 8.507059e+37
      %v2114 = vand.u32 %v2102, 2147483648
      %v2115 = vor.u32 1.1754944e-38, %v2114
      %v2116 = vsel %vm2113, %v2115, %v2111
      %v2117 = vmul.f32 %v2092, %v2116
      %v2118 = vmin.f32 %v2117, 1.0
      %v2119 = vmax.f32 %v2118, -1.0
      %v2120 = vmul.f32 %v918, %v918
      %v2121 = vmin.f32 16.0, %v2120
      %v2122 = vmul.f32 %v2121, 2.1237322e-06
      %v2123 = vadd.f32 %v2122, 0.00028619796
      %v2124 = vmul.f32 %v2121, %v2123
      %v2125 = vadd.f32 %v2124, 0.0036580483
      %v2126 = vmul.f32 %v2121, %v2125
      %v2127 = vadd.f32 %v2126, 0.05243302
      %v2128 = vmul.f32 %v2121, %v2127
      %v2129 = vadd.f32 %v2128, 0.18741608
      %v2130 = vmul.f32 %v2121, %v2129
      %v2131 = vadd.f32 %v2130, 1.1283791
      %v2132 = vmul.f32 %v918, %v2131
      %v2133 = vmul.f32 %v2121, 3.8918573e-05
      %v2134 = vadd.f32 %v2133, 0.001143296
      %v2135 = vmul.f32 %v2121, %v2134
      %v2136 = vadd.f32 %v2135, 0.014752088
      %v2137 = vmul.f32 %v2121, %v2136
      %v2138 = vadd.f32 %v2137, 0.112945676
      %v2139 = vmul.f32 %v2121, %v2138
      %v2140 = vadd.f32 %v2139, 0.4994258
      %v2141 = vmul.f32 %v2121, %v2140
      %v2142 = vadd.f32 %v2141, 1.0
      %v2143 = vrcp.pop %v2142
      %v2144 = vmul.f32 %v2142, %v2143
      %v2145 = vsub.f32 1.0, %v2144
      %v2146 = vmul.f32 %v2143, %v2145
      %v2147 = vadd.f32 %v2143, %v2146
      %vm2148 = vweird.f32 %v2142
      %vm2149 = vweird.f32 %v2143
      %vm2150 = vmor %vm2148, %vm2149
      %v2151 = vsel %vm2150, %v2143, %v2147
      %v2152 = vand.u32 2147483647, %v2142
      %vm2153 = vcmp.eq.f32.partialorder %v2152, 8.507059e+37
      %v2154 = vand.u32 %v2142, 2147483648
      %v2155 = vor.u32 1.1754944e-38, %v2154
      %v2156 = vsel %vm2153, %v2155, %v2151
      %v2157 = vmul.f32 %v2132, %v2156
      %v2158 = vmin.f32 %v2157, 1.0
      %v2159 = vmax.f32 %v2158, -1.0
      %v2160 = vmul.f32 %v919, %v919
      %v2161 = vmin.f32 16.0, %v2160
      %v2162 = vmul.f32 %v2161, 2.1237322e-06
      %v2163 = vadd.f32 %v2162, 0.00028619796
      %v2164 = vmul.f32 %v2161, %v2163
      %v2165 = vadd.f32 %v2164, 0.0036580483
      %v2166 = vmul.f32 %v2161, %v2165
      %v2167 = vadd.f32 %v2166, 0.05243302
      %v2168 = vmul.f32 %v2161, %v2167
      %v2169 = vadd.f32 %v2168, 0.18741608
      %v2170 = vmul.f32 %v2161, %v2169
      %v2171 = vadd.f32 %v2170, 1.1283791
      %v2172 = vmul.f32 %v919, %v2171
      %v2173 = vmul.f32 %v2161, 3.8918573e-05
      %v2174 = vadd.f32 %v2173, 0.001143296
      %v2175 = vmul.f32 %v2161, %v2174
      %v2176 = vadd.f32 %v2175, 0.014752088
      %v2177 = vmul.f32 %v2161, %v2176
      %v2178 = vadd.f32 %v2177, 0.112945676
      %v2179 = vmul.f32 %v2161, %v2178
      %v2180 = vadd.f32 %v2179, 0.4994258
      %v2181 = vmul.f32 %v2161, %v2180
      %v2182 = vadd.f32 %v2181, 1.0
      %v2183 = vrcp.pop %v2182
      %v2184 = vmul.f32 %v2182, %v2183
      %v2185 = vsub.f32 1.0, %v2184
      %v2186 = vmul.f32 %v2183, %v2185
      %v2187 = vadd.f32 %v2183, %v2186
      %vm2188 = vweird.f32 %v2182
      %vm2189 = vweird.f32 %v2183
      %vm2190 = vmor %vm2188, %vm2189
      %v2191 = vsel %vm2190, %v2183, %v2187
      %v2192 = vand.u32 2147483647, %v2182
      %vm2193 = vcmp.eq.f32.partialorder %v2192, 8.507059e+37
      %v2194 = vand.u32 %v2182, 2147483648
      %v2195 = vor.u32 1.1754944e-38, %v2194
      %v2196 = vsel %vm2193, %v2195, %v2191
      %v2197 = vmul.f32 %v2172, %v2196
      %v2198 = vmin.f32 %v2197, 1.0
      %v2199 = vmax.f32 %v2198, -1.0
      %v2200 = vadd.f32 %v959, 1.0
      %v2201 = vadd.f32 %v999, 1.0
      %v2202 = vadd.f32 %v1039, 1.0
      %v2203 = vadd.f32 %v1079, 1.0
      %v2204 = vadd.f32 %v1119, 1.0
      %v2205 = vadd.f32 %v1159, 1.0
      %v2206 = vadd.f32 %v1199, 1.0
      %v2207 = vadd.f32 %v1239, 1.0
      %v2208 = vadd.f32 %v1279, 1.0
      %v2209 = vadd.f32 %v1319, 1.0
      %v2210 = vadd.f32 %v1359, 1.0
      %v2211 = vadd.f32 %v1399, 1.0
      %v2212 = vadd.f32 %v1439, 1.0
      %v2213 = vadd.f32 %v1479, 1.0
      %v2214 = vadd.f32 %v1519, 1.0
      %v2215 = vadd.f32 %v1559, 1.0
      %v2216 = vadd.f32 %v1599, 1.0
      %v2217 = vadd.f32 %v1639, 1.0
      %v2218 = vadd.f32 %v1679, 1.0
      %v2219 = vadd.f32 %v1719, 1.0
      %v2220 = vadd.f32 %v1759, 1.0
      %v2221 = vadd.f32 %v1799, 1.0
      %v2222 = vadd.f32 %v1839, 1.0
      %v2223 = vadd.f32 %v1879, 1.0
      %v2224 = vadd.f32 %v1919, 1.0
      %v2225 = vadd.f32 %v1959, 1.0
      %v2226 = vadd.f32 %v1999, 1.0
      %v2227 = vadd.f32 %v2039, 1.0
      %v2228 = vadd.f32 %v2079, 1.0
      %v2229 = vadd.f32 %v2119, 1.0
      %v2230 = vadd.f32 %v2159, 1.0
      %v2231 = vadd.f32 %v2199, 1.0
      %v2232 = vmul.f32 %v856, %v2200
      %v2233 = vmul.f32 %v857, %v2201
      %v2234 = vmul.f32 %v858, %v2202
      %v2235 = vmul.f32 %v859, %v2203
      %v2236 = vmul.f32 %v860, %v2204
      %v2237 = vmul.f32 %v861, %v2205
      %v2238 = vmul.f32 %v862, %v2206
      %v2239 = vmul.f32 %v863, %v2207
      %v2240 = vmul.f32 %v864, %v2208
      %v2241 = vmul.f32 %v865, %v2209
      %v2242 = vmul.f32 %v866, %v2210
      %v2243 = vmul.f32 %v867, %v2211
      %v2244 = vmul.f32 %v868, %v2212
      %v2245 = vmul.f32 %v869, %v2213
      %v2246 = vmul.f32 %v870, %v2214
      %v2247 = vmul.f32 %v871, %v2215
      %v2248 = vmul.f32 %v872, %v2216
      %v2249 = vmul.f32 %v873, %v2217
      %v2250 = vmul.f32 %v874, %v2218
      %v2251 = vmul.f32 %v875, %v2219
      %v2252 = vmul.f32 %v876, %v2220
      %v2253 = vmul.f32 %v877, %v2221
      %v2254 = vmul.f32 %v878, %v2222
      %v2255 = vmul.f32 %v879, %v2223
      %v2256 = vmul.f32 %v880, %v2224
      %v2257 = vmul.f32 %v881, %v2225
      %v2258 = vmul.f32 %v882, %v2226
      %v2259 = vmul.f32 %v883, %v2227
      %v2260 = vmul.f32 %v884, %v2228
      %v2261 = vmul.f32 %v885, %v2229
      %v2262 = vmul.f32 %v886, %v2230
      %v2263 = vmul.f32 %v887, %v2231
      %v2264 = vmul.f32 %v792, %v2232
      %v2265 = vmul.f32 %v793, %v2233
      %v2266 = vmul.f32 %v794, %v2234
      %v2267 = vmul.f32 %v795, %v2235
      %v2268 = vmul.f32 %v796, %v2236
      %v2269 = vmul.f32 %v797, %v2237
      %v2270 = vmul.f32 %v798, %v2238
      %v2271 = vmul.f32 %v799, %v2239
      %v2272 = vmul.f32 %v800, %v2240
      %v2273 = vmul.f32 %v801, %v2241
      %v2274 = vmul.f32 %v802, %v2242
      %v2275 = vmul.f32 %v803, %v2243
      %v2276 = vmul.f32 %v804, %v2244
      %v2277 = vmul.f32 %v805, %v2245
      %v2278 = vmul.f32 %v806, %v2246
      %v2279 = vmul.f32 %v807, %v2247
      %v2280 = vmul.f32 %v808, %v2248
      %v2281 = vmul.f32 %v809, %v2249
      %v2282 = vmul.f32 %v810, %v2250
      %v2283 = vmul.f32 %v811, %v2251
      %v2284 = vmul.f32 %v812, %v2252
      %v2285 = vmul.f32 %v813, %v2253
      %v2286 = vmul.f32 %v814, %v2254
      %v2287 = vmul.f32 %v815, %v2255
      %v2288 = vmul.f32 %v816, %v2256
      %v2289 = vmul.f32 %v817, %v2257
      %v2290 = vmul.f32 %v818, %v2258
      %v2291 = vmul.f32 %v819, %v2259
      %v2292 = vmul.f32 %v820, %v2260
      %v2293 = vmul.f32 %v821, %v2261
      %v2294 = vmul.f32 %v822, %v2262
      %v2295 = vmul.f32 %v823, %v2263
      %v2296 = vpack.c.bf16 %v2264, %v2264
      %v2297 = vpack.c.bf16 %v2265, %v2265
      %v2298 = vpack.c.bf16 %v2266, %v2266
      %v2299 = vpack.c.bf16 %v2267, %v2267
      %v2300 = vpack.c.bf16 %v2268, %v2268
      %v2301 = vpack.c.bf16 %v2269, %v2269
      %v2302 = vpack.c.bf16 %v2270, %v2270
      %v2303 = vpack.c.bf16 %v2271, %v2271
      %v2304 = vpack.c.bf16 %v2272, %v2272
      %v2305 = vpack.c.bf16 %v2273, %v2273
      %v2306 = vpack.c.bf16 %v2274, %v2274
      %v2307 = vpack.c.bf16 %v2275, %v2275
      %v2308 = vpack.c.bf16 %v2276, %v2276
      %v2309 = vpack.c.bf16 %v2277, %v2277
      %v2310 = vpack.c.bf16 %v2278, %v2278
      %v2311 = vpack.c.bf16 %v2279, %v2279
      %v2312 = vpack.c.bf16 %v2280, %v2280
      %v2313 = vpack.c.bf16 %v2281, %v2281
      %v2314 = vpack.c.bf16 %v2282, %v2282
      %v2315 = vpack.c.bf16 %v2283, %v2283
      %v2316 = vpack.c.bf16 %v2284, %v2284
      %v2317 = vpack.c.bf16 %v2285, %v2285
      %v2318 = vpack.c.bf16 %v2286, %v2286
      %v2319 = vpack.c.bf16 %v2287, %v2287
      %v2320 = vpack.c.bf16 %v2288, %v2288
      %v2321 = vpack.c.bf16 %v2289, %v2289
      %v2322 = vpack.c.bf16 %v2290, %v2290
      %v2323 = vpack.c.bf16 %v2291, %v2291
      %v2324 = vpack.c.bf16 %v2292, %v2292
      %v2325 = vpack.c.bf16 %v2293, %v2293
      %v2326 = vpack.c.bf16 %v2294, %v2294
      %v2327 = vpack.c.bf16 %v2295, %v2295
      %2328 = vst [vmem:[#allocation6] sm:$0xf] %v2296
      %2329 = vst [vmem:[#allocation6 + $0x4] sm:$0xf] %v2297
      %2330 = vst [vmem:[#allocation6 + $0x8] sm:$0xf] %v2298
      %2331 = vst [vmem:[#allocation6 + $0xc] sm:$0xf] %v2299
      %2332 = vst [vmem:[#allocation6 + $0x10] sm:$0xf] %v2300
      %2333 = vst [vmem:[#allocation6 + $0x14] sm:$0xf] %v2301
      %2334 = vst [vmem:[#allocation6 + $0x18] sm:$0xf] %v2302
      %2335 = vst [vmem:[#allocation6 + $0x1c] sm:$0xf] %v2303
      %2336 = vst [vmem:[#allocation6 + $0x20] sm:$0xf] %v2304
      %2337 = vst [vmem:[#allocation6 + $0x24] sm:$0xf] %v2305
      %2338 = vst [vmem:[#allocation6 + $0x28] sm:$0xf] %v2306
      %2339 = vst [vmem:[#allocation6 + $0x2c] sm:$0xf] %v2307
      %2340 = vst [vmem:[#allocation6 + $0x30] sm:$0xf] %v2308
      %2341 = vst [vmem:[#allocation6 + $0x34] sm:$0xf] %v2309
      %2342 = vst [vmem:[#allocation6 + $0x38] sm:$0xf] %v2310
      %2343 = vst [vmem:[#allocation6 + $0x3c] sm:$0xf] %v2311
      %2344 = vst [vmem:[#allocation6 + $0x40] sm:$0xf] %v2312
      %2345 = vst [vmem:[#allocation6 + $0x44] sm:$0xf] %v2313
      %2346 = vst [vmem:[#allocation6 + $0x48] sm:$0xf] %v2314
      %2347 = vst [vmem:[#allocation6 + $0x4c] sm:$0xf] %v2315
      %2348 = vst [vmem:[#allocation6 + $0x50] sm:$0xf] %v2316
      %2349 = vst [vmem:[#allocation6 + $0x54] sm:$0xf] %v2317
      %2350 = vst [vmem:[#allocation6 + $0x58] sm:$0xf] %v2318
      %2351 = vst [vmem:[#allocation6 + $0x5c] sm:$0xf] %v2319
      %2352 = vst [vmem:[#allocation6 + $0x60] sm:$0xf] %v2320
      %2353 = vst [vmem:[#allocation6 + $0x64] sm:$0xf] %v2321
      %2354 = vst [vmem:[#allocation6 + $0x68] sm:$0xf] %v2322
      %2355 = vst [vmem:[#allocation6 + $0x6c] sm:$0xf] %v2323
      %2356 = vst [vmem:[#allocation6 + $0x70] sm:$0xf] %v2324
      %2357 = vst [vmem:[#allocation6 + $0x74] sm:$0xf] %v2325
      %2358 = vst [vmem:[#allocation6 + $0x78] sm:$0xf] %v2326
      %2359 = vst [vmem:[#allocation6 + $0x7c] sm:$0xf] %v2327
    $region111: #{tpu_custom_call.1} parent=1 // pred_fallthru
      _
    // Predicated region
    $region112: #{tpu_custom_call.1} parent=1 // pred_check
      _
    $region113: #{tpu_custom_call.1} parent=1 // pred_check_branch
      %2361 = sbr.rel (0) target = $region115
    $region114: #{tpu_custom_call.1} parent=1 // pred_region
      %2363 = vsyncadd [#allocation7], 0
      %s2364 = sshll.u32 [#allocation6], 4
      %s2365 = int_to_ptr.vmem [resolvable:$true] %s2364
      %s2366 = sshll.u32 %s5, 4
      %s2367 = int_to_ptr.hbm [resolvable:$true] %s2366
      %2372 = dma.vmem_to_hbm [thread:$0]  %s2365, 2048, %s2367, [#allocation7], 64, 64, 4
    $region115: #{tpu_custom_call.1} parent=1 // pred_fallthru
      _
    // Predicated region
    $region116: #{tpu_custom_call.1} parent=1 // pred_check
      _
    $region117: #{tpu_custom_call.1} parent=1 // pred_check_branch
      %2374 = sbr.rel (0) target = $region119
    $region118: #{tpu_custom_call.1} parent=1 // pred_region
      %2376 = dma.done [#allocation7], 2048
    $region119: #{tpu_custom_call.1} parent=1 // pred_fallthru
      _
    %2377 = vsyncpa [#allocation7], 1

</llo_original>
